<compile_context>
chip_gen: v5e
topology: v5e:2x2
jax: 0.10.0
libtpu: 0.0.40
codegen_flags: <defaults>
</compile_context>

<pallas_src>
import numpy as np
import jax
import jax.numpy as jnp
from jax.experimental import pallas as pl
from jax.experimental.pallas import tpu as pltpu


# ----------------------------------------------------------------------------
# Deterministic parameter construction (hann window, DFT bases, mel filterbank)
# ----------------------------------------------------------------------------
def _hz_to_mel(f):
    f = np.asarray(f, dtype=np.float64)
    f_sp = 200.0 / 3.0
    mels = f / f_sp
    min_log_hz = 1000.0
    min_log_mel = min_log_hz / f_sp
    logstep = np.log(6.4) / 27.0
    return np.where(f >= min_log_hz,
                    min_log_mel + np.log(np.maximum(f, 1e-10) / min_log_hz) / logstep,
                    mels)


def _mel_to_hz(m):
    m = np.asarray(m, dtype=np.float64)
    f_sp = 200.0 / 3.0
    freqs = f_sp * m
    min_log_hz = 1000.0
    min_log_mel = min_log_hz / f_sp
    logstep = np.log(6.4) / 27.0
    return np.where(m >= min_log_mel,
                    min_log_hz * np.exp(logstep * (m - min_log_mel)),
                    freqs)


def mel_filterbank(sr, n_fft, n_mels, fmin=0.0, fmax=None):
    """Slaney-style mel filterbank (same formulation as librosa.filters.mel)."""
    if fmax is None:
        fmax = sr / 2.0
    n_freq = n_fft // 2 + 1
    fftfreqs = np.linspace(0.0, sr / 2.0, n_freq)
    mel_pts = np.linspace(_hz_to_mel(fmin), _hz_to_mel(fmax), n_mels + 2)
    mel_f = _mel_to_hz(mel_pts)
    fdiff = np.diff(mel_f)
    ramps = mel_f[:, None] - fftfreqs[None, :]
    lower = -ramps[:-2] / fdiff[:-1][:, None]
    upper = ramps[2:] / fdiff[1:][:, None]
    weights = np.maximum(0.0, np.minimum(lower, upper))
    enorm = 2.0 / (mel_f[2:n_mels + 2] - mel_f[:n_mels])
    weights = weights * enorm[:, None]
    return weights  # float64 [n_mels, n_freq]


def hann_window(win_length):
    # torch.hann_window default is periodic=True
    n = np.arange(win_length, dtype=np.float64)
    return 0.5 * (1.0 - np.cos(2.0 * np.pi * n / win_length))  # float64


def _round_up(x, m):
    return ((x + m - 1) // m) * m


# ----------------------------------------------------------------------------
# Pallas kernel: in-kernel framing (hop | n_fft) -> bf16 DFT matmuls (f32 acc)
#                -> magnitude -> mel projection -> log10
# ----------------------------------------------------------------------------
def audio2mel_kernel(chunksA_ref, chunksB_ref, basisT_ref, melfb_ref, out_ref):
    # chunksA_ref: (1, hop, F)       bf16  chunk columns [t*F, t*F + F)
    # chunksB_ref: (1, hop, 128)     bf16  chunk columns [(t+1)*F, (t+1)*F + 128)
    # basisT_ref:  (2*Kt, n_fft)     bf16  [cos_w ; sin_w], hann window folded in
    # melfb_ref:   (n_mel_pad, Kt)   f32
    # out_ref:     (1, n_mel_pad, F) f32
    kt = melfb_ref.shape[1]
    hop = chunksA_ref.shape[1]
    F = chunksA_ref.shape[2]
    n_fft = basisT_ref.shape[1]
    R = n_fft // hop                                   # chunks per frame (static)

    a = chunksA_ref[0]                                 # (hop, F)
    if R > 1:
        # Lane-aligned concat; only the first R-1 extra columns are ever used.
        win = jnp.concatenate([a, chunksB_ref[0]], axis=-1)   # (hop, F + 128)
    else:
        win = a

    basis = basisT_ref[...]                            # (2*Kt, n_fft) bf16
    # frame f, sample n = c*hop + r  ->  chunksT[r, t*F + f + c]
    # ri[k, f] = sum_c (basisT[:, c*hop:(c+1)*hop] @ win[:, c:c+F])[k, f]
    ri = jnp.dot(basis[:, 0:hop], win[:, 0:F],
                 preferred_element_type=jnp.float32)   # (2*Kt, F) f32
    for c in range(1, R):
        ri = ri + jnp.dot(basis[:, c * hop:(c + 1) * hop],
                          win[:, c:c + F],
                          preferred_element_type=jnp.float32)

    real = ri[:kt, :]                                  # sublane-aligned split
    imag = ri[kt:, :]
    mag = jnp.sqrt(real * real + imag * imag + 1e-8)   # (Kt, F) f32
    mel = jnp.dot(melfb_ref[...], mag,
                  preferred_element_type=jnp.float32)  # (n_mel_pad, F) f32
    out_ref[0] = jnp.log10(jnp.maximum(mel, 1e-5))


class Audio2Mel:
    def __init__(self, n_fft=1024, hop_length=256, win_length=1024,
                 sampling_rate=16000, n_mel_channels=80,
                 mel_fmin=0.0, mel_fmax=None, frame_tile=512):
        assert win_length == n_fft, "kernel assumes win_length == n_fft"
        # TODO(synk): configs with n_fft % hop != 0 would need the (slower)
        # gather-based framing path; all standard configs satisfy hop | n_fft.
        assert n_fft % hop_length == 0 and n_fft // hop_length <= 128, \
            "kernel framing assumes hop divides n_fft (and n_fft/hop <= 128)"
        assert frame_tile % 128 == 0, "frame_tile must be a multiple of 128"
        self.n_fft = n_fft
        self.hop_length = hop_length
        self.win_length = win_length
        self.n_mel_channels = n_mel_channels
        self.frame_tile = frame_tile

        n_freq_full = n_fft // 2 + 1
        win = hann_window(win_length)                                         # f64 (n_fft,)
        mel = mel_filterbank(sampling_rate, n_fft, n_mel_channels,
                             mel_fmin, mel_fmax)                              # f64 (n_mel, n_freq)

        # Drop the Nyquist bin if its mel weight is (numerically) zero — always
        # true for the default fmax = sr/2.  Keeps the freq axis lane-aligned.
        if np.abs(mel[:, -1]).max() <= 1e-7:
            n_freq_used = n_fft // 2
        else:
            n_freq_used = n_freq_full
        kt = _round_up(n_freq_used, 128)          # padded freq count (lane-aligned)
        n_mel_pad = _round_up(n_mel_channels, 8)  # sublane-aligned mel count

        # Window-folded, transposed DFT bases, stacked [cos_w ; sin_w]:
        #   basisT[k, n]      =  win[n] * cos(2*pi*n*k / n_fft)
        #   basisT[kt+k, n]   = -win[n] * sin(2*pi*n*k / n_fft)
        n = np.arange(n_fft, dtype=np.float64)[None, :]
        k = np.arange(n_freq_used, dtype=np.float64)[:, None]
        ang = 2.0 * np.pi * n * k / n_fft
        cos_w = np.cos(ang) * win[None, :]
        sin_w = -np.sin(ang) * win[None, :]
        basisT = np.zeros((2 * kt, n_fft), dtype=np.float64)
        basisT[:n_freq_used] = cos_w
        basisT[kt:kt + n_freq_used] = sin_w

        melfb = np.zeros((n_mel_pad, kt), dtype=np.float64)
        melfb[:n_mel_channels, :n_freq_used] = mel[:, :n_freq_used]

        self.kt = kt
        self.n_mel_pad = n_mel_pad
        # bf16 DFT basis (MXU fast path, f32 accumulation in-kernel).
        self.basisT = jnp.asarray(basisT.astype(np.float32)).astype(jnp.bfloat16)
        self.melfb = jnp.asarray(melfb.astype(np.float32))     # (n_mel_pad, Kt)

    def __call__(self, audio):
        # audio: [B, 1, T] float32
        B = audio.shape[0]
        n_fft, hop = self.n_fft, self.hop_length
        R = n_fft // hop
        p = (n_fft - hop) // 2
        padded = jnp.pad(audio, ((0, 0), (0, 0), (p, p)), mode="reflect")
        padded = jnp.squeeze(padded, axis=1)                    # [B, T + 2p]
        L = padded.shape[-1]
        n_frames = 1 + (L - n_fft) // hop

        # Frame tile = kernel lane axis (multiple of 128 -> lane-dense stores).
        nf128 = _round_up(n_frames, 128)
        F = min(self.frame_tile, nf128)
        # v7x megacore: with B == 1 keep >= 2 parallel frame tiles when possible.
        if B == 1 and F == nf128 and nf128 > 128:
            F = _round_up(nf128 // 2, 128)
        n_frames_pad = _round_up(n_frames, F)
        n_tiles = n_frames_pad // F

        # Chunk layout: chunksT[b, r, j] = padded[b, j*hop + r]; frame f sample
        # n = c*hop + r lives at chunksT[b, r, f + c]  (c in [0, R)).  The +128
        # lane padding keeps the 128-wide overlap block in bounds for every tile.
        n_chunks_pad = n_frames_pad + 128
        L_need = n_chunks_pad * hop
        if L_need > L:
            padded = jnp.pad(padded, ((0, 0), (0, L_need - L)))
        chunksT = jnp.swapaxes(padded.reshape(B, n_chunks_pad, hop), 1, 2)
        chunksT = chunksT.astype(jnp.bfloat16)                  # [B, hop, n_chunks_pad]

        kt, n_mel_pad = self.kt, self.n_mel_pad
        out = pl.pallas_call(
            audio2mel_kernel,
            out_shape=jax.ShapeDtypeStruct((B, n_mel_pad, n_frames_pad), jnp.float32),
            grid_spec=pltpu.PrefetchScalarGridSpec(
                num_scalar_prefetch=0,
                grid=(B, n_tiles),
                in_specs=[
                    # main chunk tile: columns [t*F, t*F + F)
                    pl.BlockSpec((1, hop, F), lambda b, t: (b, 0, t)),
                    # overlap tile: 128 columns starting at (t+1)*F (same array)
                    pl.BlockSpec((1, hop, 128),
                                 lambda b, t: (b, 0, (t + 1) * (F // 128))),
                    pl.BlockSpec((2 * kt, n_fft), lambda b, t: (0, 0)),
                    pl.BlockSpec((n_mel_pad, kt), lambda b, t: (0, 0)),
                ],
                out_specs=pl.BlockSpec((1, n_mel_pad, F), lambda b, t: (b, 0, t)),
            ),
            compiler_params=pltpu.CompilerParams(
                dimension_semantics=("parallel", "parallel"),
                vmem_limit_bytes=32 * 1024 * 1024),
        )(chunksT, chunksT, self.basisT, self.melfb)

        # Slice off the mel / frame padding; already in [B, n_mel, n_frames] layout.
        return out[:, :self.n_mel_channels, :n_frames]


# ----------------------------------------------------------------------------
# Pure-JAX reference (full n_freq, f32, unfused math, PyTorch semantics)
# ----------------------------------------------------------------------------
def audio2mel_ref(n_fft, hop, win_length, sr, n_mel, fmin, fmax, audio):
    p = (n_fft - hop) // 2
    padded = jnp.squeeze(jnp.pad(audio, ((0, 0), (0, 0), (p, p)), mode="reflect"), 1)
    L = padded.shape[-1]
    n_frames = 1 + (L - n_fft) // hop
    idx = np.arange(n_frames)[:, None] * hop + np.arange(n_fft)[None, :]
    win = jnp.asarray(hann_window(win_length).astype(np.float32))
    frames = padded[:, idx] * win                                # (B, n_frames, n_fft)

    n_freq = n_fft // 2 + 1
    n = np.arange(n_fft, dtype=np.float64)[:, None]
    k = np.arange(n_freq, dtype=np.float64)[None, :]
    ang = 2.0 * np.pi * n * k / n_fft
    cos_m = jnp.asarray(np.cos(ang).astype(np.float32))
    sin_m = jnp.asarray((-np.sin(ang)).astype(np.float32))

    hi = jax.lax.Precision.HIGHEST
    real = jnp.einsum("btf,fk->btk", frames, cos_m, precision=hi)
    imag = jnp.einsum("btf,fk->btk", frames, sin_m, precision=hi)
    mag = jnp.sqrt(real * real + imag * imag + 1e-8)
    melw = jnp.asarray(mel_filterbank(sr, n_fft, n_mel, fmin, fmax).astype(np.float32))
    mel = jnp.einsum("btk,mk->btm", mag, melw, precision=hi)
    return jnp.transpose(jnp.log10(jnp.maximum(mel, 1e-5)), (0, 2, 1))


if __name__ == "__main__":
    key = jax.random.PRNGKey(0)
    B, T = 2, 2048
    audio = jax.random.normal(key, (B, 1, T), dtype=jnp.float32)

    m = Audio2Mel(n_fft=256, hop_length=64, win_length=256,
                  sampling_rate=16000, n_mel_channels=80)

    out = jax.block_until_ready(m(audio))
    ref = jax.block_until_ready(
        audio2mel_ref(256, 64, 256, 16000, 80, 0.0, None, audio))

    out_np = np.asarray(out)
    ref_np = np.asarray(ref)
    # bf16 MXU inputs (basis + frames) vs f32 reference: per-element tolerance
    # loosened deliberately; the mean abs error of the log-mel must stay tiny.
    np.testing.assert_allclose(out_np, ref_np, rtol=1e-1, atol=1e-1)
    assert float(np.mean(np.abs(out_np - ref_np))) < 2e-2, "mean log-mel error too large"
    print("KERNEL_OK")
</pallas_src>

<mosaic_0001>
module attributes {stable_mosaic.version = 11 : i64} {
  func.func @audio2mel_kernel(%arg0: i32, %arg1: i32, %arg2: memref<1x64x128xbf16, #tpu.memory_space<vmem>>, %arg3: memref<1x64x128xbf16, #tpu.memory_space<vmem>>, %arg4: memref<256x256xbf16, #tpu.memory_space<vmem>>, %arg5: memref<80x128xf32, #tpu.memory_space<vmem>>, %arg6: memref<1x80x128xf32, #tpu.memory_space<vmem>>) attributes {dimension_semantics = [#tpu.dimension_semantics<parallel>, #tpu.dimension_semantics<parallel>], iteration_bounds = array<i64: 2, 1>, scalar_prefetch = 0 : i64, scratch_operands = 0 : i64, tpu.core_type = #tpu.core_type<tc>, window_params = [{transform_indices = @transform_0, window_bounds = array<i64: 1, 64, 128>}, {transform_indices = @transform_1, window_bounds = array<i64: 1, 64, 128>}, {pipeline_mode = #tpu.pipeline_mode<synchronous>, transform_indices = @transform_2, window_bounds = array<i64: 256, 256>}, {pipeline_mode = #tpu.pipeline_mode<synchronous>, transform_indices = @transform_3, window_bounds = array<i64: 80, 128>}, {transform_indices = @transform_4, window_bounds = array<i64: 1, 80, 128>}]} {
    %c0 = arith.constant 0 : index
    %c0_0 = arith.constant 0 : index
    %c0_1 = arith.constant 0 : index
    %0 = vector.load %arg2[%c0, %c0_0, %c0_1] : memref<1x64x128xbf16, #tpu.memory_space<vmem>>, vector<1x64x128xbf16>
    %1 = vector.shape_cast %0 : vector<1x64x128xbf16> to vector<64x128xbf16>
    %c0_2 = arith.constant 0 : index
    %c0_3 = arith.constant 0 : index
    %c0_4 = arith.constant 0 : index
    %2 = vector.load %arg3[%c0_2, %c0_3, %c0_4] : memref<1x64x128xbf16, #tpu.memory_space<vmem>>, vector<1x64x128xbf16>
    %3 = vector.shape_cast %2 : vector<1x64x128xbf16> to vector<64x128xbf16>
    %4 = tpu.concatenate %1, %3 in 1 : vector<64x128xbf16>, vector<64x128xbf16> -> vector<64x256xbf16>
    %c0_5 = arith.constant 0 : index
    %c0_6 = arith.constant 0 : index
    %5 = vector.load %arg4[%c0_5, %c0_6] : memref<256x256xbf16, #tpu.memory_space<vmem>>, vector<256x256xbf16>
    %6 = vector.extract_strided_slice %5 {offsets = [0, 0], sizes = [256, 64], strides = [1, 1]} : vector<256x256xbf16> to vector<256x64xbf16>
    %7 = vector.extract_strided_slice %4 {offsets = [0, 0], sizes = [64, 128], strides = [1, 1]} : vector<64x256xbf16> to vector<64x128xbf16>
    %cst = arith.constant dense<0.000000e+00> : vector<256x128xf32>
    %8 = tpu.matmul %6, %7, %cst {dimension_numbers = #tpu.dot_dimension_numbers<[1], [0], [0], [1], [0, 0, 1, 1], [], []>} : vector<256x64xbf16>, vector<64x128xbf16>, vector<256x128xf32> -> vector<256x128xf32>
    %9 = vector.extract_strided_slice %5 {offsets = [0, 64], sizes = [256, 64], strides = [1, 1]} : vector<256x256xbf16> to vector<256x64xbf16>
    %10 = vector.extract_strided_slice %4 {offsets = [0, 1], sizes = [64, 128], strides = [1, 1]} : vector<64x256xbf16> to vector<64x128xbf16>
    %cst_7 = arith.constant dense<0.000000e+00> : vector<256x128xf32>
    %11 = tpu.matmul %9, %10, %cst_7 {dimension_numbers = #tpu.dot_dimension_numbers<[1], [0], [0], [1], [0, 0, 1, 1], [], []>} : vector<256x64xbf16>, vector<64x128xbf16>, vector<256x128xf32> -> vector<256x128xf32>
    %12 = arith.addf %8, %11 : vector<256x128xf32>
    %13 = vector.extract_strided_slice %5 {offsets = [0, 128], sizes = [256, 64], strides = [1, 1]} : vector<256x256xbf16> to vector<256x64xbf16>
    %14 = vector.extract_strided_slice %4 {offsets = [0, 2], sizes = [64, 128], strides = [1, 1]} : vector<64x256xbf16> to vector<64x128xbf16>
    %cst_8 = arith.constant dense<0.000000e+00> : vector<256x128xf32>
    %15 = tpu.matmul %13, %14, %cst_8 {dimension_numbers = #tpu.dot_dimension_numbers<[1], [0], [0], [1], [0, 0, 1, 1], [], []>} : vector<256x64xbf16>, vector<64x128xbf16>, vector<256x128xf32> -> vector<256x128xf32>
    %16 = arith.addf %12, %15 : vector<256x128xf32>
    %17 = vector.extract_strided_slice %5 {offsets = [0, 192], sizes = [256, 64], strides = [1, 1]} : vector<256x256xbf16> to vector<256x64xbf16>
    %18 = vector.extract_strided_slice %4 {offsets = [0, 3], sizes = [64, 128], strides = [1, 1]} : vector<64x256xbf16> to vector<64x128xbf16>
    %cst_9 = arith.constant dense<0.000000e+00> : vector<256x128xf32>
    %19 = tpu.matmul %17, %18, %cst_9 {dimension_numbers = #tpu.dot_dimension_numbers<[1], [0], [0], [1], [0, 0, 1, 1], [], []>} : vector<256x64xbf16>, vector<64x128xbf16>, vector<256x128xf32> -> vector<256x128xf32>
    %20 = arith.addf %16, %19 : vector<256x128xf32>
    %21 = vector.extract_strided_slice %20 {offsets = [0, 0], sizes = [128, 128], strides = [1, 1]} : vector<256x128xf32> to vector<128x128xf32>
    %22 = vector.extract_strided_slice %20 {offsets = [128, 0], sizes = [128, 128], strides = [1, 1]} : vector<256x128xf32> to vector<128x128xf32>
    %23 = arith.mulf %21, %21 : vector<128x128xf32>
    %24 = arith.mulf %22, %22 : vector<128x128xf32>
    %25 = arith.addf %23, %24 : vector<128x128xf32>
    %cst_10 = arith.constant 9.99999993E-9 : f32
    %26 = vector.broadcast %cst_10 : f32 to vector<128x128xf32>
    %27 = arith.addf %25, %26 : vector<128x128xf32>
    %28 = math.sqrt %27 : vector<128x128xf32>
    %c0_11 = arith.constant 0 : index
    %c0_12 = arith.constant 0 : index
    %29 = vector.load %arg5[%c0_11, %c0_12] : memref<80x128xf32, #tpu.memory_space<vmem>>, vector<80x128xf32>
    %cst_13 = arith.constant dense<0.000000e+00> : vector<80x128xf32>
    %30 = tpu.matmul %29, %28, %cst_13 {dimension_numbers = #tpu.dot_dimension_numbers<[1], [0], [0], [1], [0, 0, 1, 1], [], []>} : vector<80x128xf32>, vector<128x128xf32>, vector<80x128xf32> -> vector<80x128xf32>
    %cst_14 = arith.constant 9.99999974E-6 : f32
    %31 = vector.broadcast %cst_14 : f32 to vector<80x128xf32>
    %32 = arith.maximumf %30, %31 : vector<80x128xf32>
    %33 = math.log %32 : vector<80x128xf32>
    %cst_15 = arith.constant 0.434294492 : f32
    %34 = vector.broadcast %cst_15 : f32 to vector<80x128xf32>
    %35 = arith.mulf %33, %34 : vector<80x128xf32>
    %c0_16 = arith.constant 0 : index
    %c0_17 = arith.constant 0 : index
    %c0_18 = arith.constant 0 : index
    %36 = vector.load %arg6[%c0_16, %c0_17, %c0_18] : memref<1x80x128xf32, #tpu.memory_space<vmem>>, vector<1x80x128xf32>
    %37 = vector.shape_cast %36 : vector<1x80x128xf32> to vector<80x128xf32>
    %38 = vector.shape_cast %35 : vector<80x128xf32> to vector<1x80x128xf32>
    tpu.vector_store %arg6[%c0_16, %c0_17, %c0_18], %38 {strides = array<i32>} : memref<1x80x128xf32, #tpu.memory_space<vmem>>, vector<1x80x128xf32>,
    return
  }
  func.func @transform_0(%arg0: i32, %arg1: i32) -> (i32, i32, i32) {
    %c0_i32 = arith.constant 0 : i32
    %c0_i32_0 = arith.constant 0 : i32
    return %arg0, %c0_i32, %arg1 : i32, i32, i32
  }
  func.func @transform_1(%arg0: i32, %arg1: i32) -> (i32, i32, i32) {
    %c1_i32 = arith.constant 1 : i32
    %0 = arith.addi %arg1, %c1_i32 : i32
    %c1_i32_0 = arith.constant 1 : i32
    %1 = arith.muli %0, %c1_i32_0 : i32
    %c0_i32 = arith.constant 0 : i32
    %c0_i32_1 = arith.constant 0 : i32
    return %arg0, %c0_i32, %1 : i32, i32, i32
  }
  func.func @transform_2(%arg0: i32, %arg1: i32) -> (i32, i32) {
    %c0_i32 = arith.constant 0 : i32
    %c0_i32_0 = arith.constant 0 : i32
    %c0_i32_1 = arith.constant 0 : i32
    return %c0_i32, %c0_i32_0 : i32, i32
  }
  func.func @transform_3(%arg0: i32, %arg1: i32) -> (i32, i32) {
    %c0_i32 = arith.constant 0 : i32
    %c0_i32_0 = arith.constant 0 : i32
    %c0_i32_1 = arith.constant 0 : i32
    return %c0_i32, %c0_i32_0 : i32, i32
  }
  func.func @transform_4(%arg0: i32, %arg1: i32) -> (i32, i32, i32) {
    %c0_i32 = arith.constant 0 : i32
    %c0_i32_0 = arith.constant 0 : i32
    return %arg0, %c0_i32, %arg1 : i32, i32, i32
  }
}

</mosaic_0001>

<llo_original>
// kernel: tpu_custom_call.1
$region0: #{tpu_custom_call.1}
  #allocation0 [shape = 'u32[]', space=smem, size = 0x4, offset = 0x4, fixed_abs, tag = 'smem constant byte address 0x4 - core index']
  #allocation1 [shape = 'u32[72,128]{1,0:T(1,128)}', space=vmem, size = 0x9000, scoped, tag = 'internal scratch']
  %s0 = inlined_call_operand.hbm [shape: bf16[2,64,256], index: 0, kind: input, shape index: {}]
  %s1 = inlined_call_operand.hbm [shape: bf16[2,64,256], index: 1, kind: input, shape index: {}]
  %s2 = inlined_call_operand.hbm [shape: bf16[256,256], index: 2, kind: input, shape index: {}]
  %s3 = inlined_call_operand.hbm [shape: f32[80,128], index: 3, kind: input, shape index: {}]
  %s4 = inlined_call_operand.hbm [shape: f32[2,80,128], index: 4, kind: output, shape index: {}]
  %s5 = sld [smem:[#allocation0]]
  $region65: #{tpu_custom_call.1} parent=0
    _
  %s7 = ssub.s32 1, %s5
  %s8 = scalar_select 0, %s7, %s5
  $region1: #{tpu_custom_call.1} parent=0
    #allocation2 [shape = 'u8[32768]{0}', space=vmem, size = 0x8000, scoped, tag = 'input window, operand 0']
    #allocation3 [shape = 's32[2]{0}', space=sflag, size = 0x8, scoped, tag = 'scoped memory for tpu_custom_call.1']
    #allocation4 [shape = 's32[2]{0}', space=sflag, size = 0x8, scoped, tag = 'scoped memory for tpu_custom_call.1']
    #allocation5 [shape = 'u8[32768]{0}', space=vmem, size = 0x8000, scoped, tag = 'input window, operand 1']
    #allocation6 [shape = 's32[2]{0}', space=sflag, size = 0x8, scoped, tag = 'scoped memory for tpu_custom_call.1']
    #allocation7 [shape = 'u8[131072]{0}', space=vmem, size = 0x20000, scoped, tag = 'input window, operand 2, single buffered']
    #allocation8 [shape = 'u8[40960]{0}', space=vmem, size = 0xa000, scoped, tag = 'input window, operand 3, single buffered']
    #allocation9 [shape = 's32[1]{0}', space=sflag, size = 0x4, scoped, tag = 'scoped memory for tpu_custom_call.1']
    #allocation10 [shape = 'u8[81920]{0}', space=vmem, size = 0x14000, scoped, tag = 'output window, operand 0']
    %9 = vsyncpa [#allocation3], 0
    %s10 = scalar_lea.sflag [#allocation3], 1
    %11 = vsyncpa %s10, 0
    %12 = vsyncpa [#allocation6], 0
    %s13 = scalar_lea.sflag [#allocation6], 1
    %14 = vsyncpa %s13, 0
    %15 = vsyncpa [#allocation9], 0
    %16 = vsyncpa [#allocation4], 0
    %s17 = scalar_lea.sflag [#allocation4], 1
    %18 = vsyncpa %s17, 0
    loop: start=0, step=1, limit=4
    $region2: #{tpu_custom_call.1} parent=1 // loop_pre_header
      _
    $region3: #{tpu_custom_call.1} parent=1 // loop_header
      %s20 = sphi 0, %s24
      %p21 = scmp.ge.s32.totalorder %s20, 4
      %s27 = sphi 0, %s39
      %s28 = sphi 0, %s35
      %s29 = sphi 0, %s27
      %s30 = sphi 0, %s28
      %s31 = sphi 0, %s29
      %s32 = sphi 0, %s30
      %s44 = sphi 0, %s46
      %s47 = sphi 0, %s44
      %s48 = sphi 0, %s47
      %s64 = sphi 0, %s48
      %s74 = sphi 0, %s76
      %s77 = sphi 0, %s74
      %s78 = sphi 0, %s77
      %s94 = sphi 0, %s78
      %s98 = sphi 0, %s98
      %s100 = sphi 0, %s98
      %s101 = sphi 0, %s100
      %s115 = sphi 0, %s101
      %s119 = sphi 0, %s119
      %s121 = sphi 0, %s119
      %s122 = sphi 0, %s121
      %s136 = sphi 0, %s122
      %s144 = sphi 0, %s146
      %s147 = sphi 0, %s144
      %s148 = sphi 0, %s147
      %s164 = sphi 0, %s148
    $region4: #{tpu_custom_call.1} parent=1 // loop_header_branch
      %23 = sbr.rel (%p21) target = $region8
    $region5: #{tpu_custom_call.1} parent=1 // loop_body
      %s25 = ssub.s32 %s20, 1
      %s26 = ssub.s32 %s20, 2
      %s33 = sadd.s32 1, %s28
      %p34 = scmp.ge.s32.totalorder %s33, 1
      %s35 = scalar_select %p34, 0, %s33
      %s36 = sadd.s32 1, %s27
      %s37 = scalar_select %p34, %s36, %s27
      %p38 = scmp.ge.s32.totalorder %s37, 2
      %s39 = scalar_select %p38, 0, %s37
      %s40 = ssub.s32 %s27, %s39
      %s41 = ssub.s32 %s28, %s35
      %s42 = sor.u32 %s40, %s41
      %p43 = scmp.eq.s32.totalorder %s42, 0
      %s45 = sadd.s32 %s44, 1
      %s46 = scalar_select %p43, %s44, %s45
      %p49 = pneg %p43
      %p50 = scmp.eq.s32.totalorder %s20, 1
      %p51 = por %p49, %p50
      %p52 = scmp.ne.s32.totalorder %s44, %s47
      %p53 = scmp.eq.s32.totalorder %s20, 0
      %p54 = por %p52, %p53
      %p55 = scmp.ne.s32.totalorder %s44, %s47
      %p56 = scmp.eq.s32.totalorder %s25, 1
      %p57 = por %p55, %p56
      %p58 = scmp.ne.s32.totalorder %s47, %s48
      %p59 = scmp.eq.s32.totalorder %s25, 0
      %p60 = por %p58, %p59
      %p61 = scmp.ne.s32.totalorder %s47, %s48
      %p62 = scmp.eq.s32.totalorder %s26, 1
      %p63 = por %p61, %p62
      %p65 = scmp.ne.s32.totalorder %s48, %s64
      %p66 = scmp.eq.s32.totalorder %s26, 0
      %p67 = por %p65, %p66
      %s68 = sadd.s32 %s28, 1
      %s69 = sadd.s32 %s35, 1
      %s70 = ssub.s32 %s27, %s39
      %s71 = ssub.s32 %s68, %s69
      %s72 = sor.u32 %s70, %s71
      %p73 = scmp.eq.s32.totalorder %s72, 0
      %s75 = sadd.s32 %s74, 1
      %s76 = scalar_select %p73, %s74, %s75
      %p79 = pneg %p73
      %p80 = scmp.eq.s32.totalorder %s20, 1
      %p81 = por %p79, %p80
      %p82 = scmp.ne.s32.totalorder %s74, %s77
      %p83 = scmp.eq.s32.totalorder %s20, 0
      %p84 = por %p82, %p83
      %p85 = scmp.ne.s32.totalorder %s74, %s77
      %p86 = scmp.eq.s32.totalorder %s25, 1
      %p87 = por %p85, %p86
      %p88 = scmp.ne.s32.totalorder %s77, %s78
      %p89 = scmp.eq.s32.totalorder %s25, 0
      %p90 = por %p88, %p89
      %p91 = scmp.ne.s32.totalorder %s77, %s78
      %p92 = scmp.eq.s32.totalorder %s26, 1
      %p93 = por %p91, %p92
      %p95 = scmp.ne.s32.totalorder %s78, %s94
      %p96 = scmp.eq.s32.totalorder %s26, 0
      %p97 = por %p95, %p96
      %s99 = sadd.s32 %s98, 1
      %p102 = scmp.eq.s32.totalorder %s20, 1
      %p103 = scmp.ne.s32.totalorder %s98, %s100
      %p104 = scmp.eq.s32.totalorder %s20, 0
      %p105 = por %p103, %p104
      %p106 = scmp.ne.s32.totalorder %s98, %s100
      %p107 = scmp.eq.s32.totalorder %s25, 1
      %p108 = por %p106, %p107
      %p109 = scmp.ne.s32.totalorder %s100, %s101
      %p110 = scmp.eq.s32.totalorder %s25, 0
      %p111 = por %p109, %p110
      %p112 = scmp.ne.s32.totalorder %s100, %s101
      %p113 = scmp.eq.s32.totalorder %s26, 1
      %p114 = por %p112, %p113
      %p116 = scmp.ne.s32.totalorder %s101, %s115
      %p117 = scmp.eq.s32.totalorder %s26, 0
      %p118 = por %p116, %p117
      %s120 = sadd.s32 %s119, 1
      %p123 = scmp.eq.s32.totalorder %s20, 1
      %p124 = scmp.ne.s32.totalorder %s119, %s121
      %p125 = scmp.eq.s32.totalorder %s20, 0
      %p126 = por %p124, %p125
      %p127 = scmp.ne.s32.totalorder %s119, %s121
      %p128 = scmp.eq.s32.totalorder %s25, 1
      %p129 = por %p127, %p128
      %p130 = scmp.ne.s32.totalorder %s121, %s122
      %p131 = scmp.eq.s32.totalorder %s25, 0
      %p132 = por %p130, %p131
      %p133 = scmp.ne.s32.totalorder %s121, %s122
      %p134 = scmp.eq.s32.totalorder %s26, 1
      %p135 = por %p133, %p134
      %p137 = scmp.ne.s32.totalorder %s122, %s136
      %p138 = scmp.eq.s32.totalorder %s26, 0
      %p139 = por %p137, %p138
      %s140 = ssub.s32 %s27, %s39
      %s141 = ssub.s32 %s28, %s35
      %s142 = sor.u32 %s140, %s141
      %p143 = scmp.eq.s32.totalorder %s142, 0
      %s145 = sadd.s32 %s144, 1
      %s146 = scalar_select %p143, %s144, %s145
      %p149 = pneg %p143
      %p150 = scmp.eq.s32.totalorder %s20, 1
      %p151 = por %p149, %p150
      %p152 = scmp.ne.s32.totalorder %s144, %s147
      %p153 = scmp.eq.s32.totalorder %s20, 0
      %p154 = por %p152, %p153
      %p155 = scmp.ne.s32.totalorder %s144, %s147
      %p156 = scmp.eq.s32.totalorder %s25, 1
      %p157 = por %p155, %p156
      %p158 = scmp.ne.s32.totalorder %s147, %s148
      %p159 = scmp.eq.s32.totalorder %s25, 0
      %p160 = por %p158, %p159
      %p161 = scmp.ne.s32.totalorder %s147, %s148
      %p162 = scmp.eq.s32.totalorder %s26, 1
      %p163 = por %p161, %p162
      %p165 = scmp.ne.s32.totalorder %s148, %s164
      %p166 = scmp.eq.s32.totalorder %s26, 0
      %p167 = por %p165, %p166
      %p168 = scmp.le.s32.totalorder 1, %s20
      %p169 = scmp.lt.s32.totalorder %s20, 3
      %p170 = pnand %p168, %p169
      %p171 = pneg %p170
      // Predicated region
      $region9: #{tpu_custom_call.1} parent=5 // pred_check
        _
      $region10: #{tpu_custom_call.1} parent=5 // pred_check_branch
        %173 = sbr.rel (%p170) target = $region12
      $region11: #{tpu_custom_call.1} parent=5 // pred_region
        %s174 = ssub.s32 %s20, 1
        // Predicated region
        $region13: #{tpu_custom_call.1} parent=11 // pred_check
          %p175 = pneg %p111
        $region14: #{tpu_custom_call.1} parent=11 // pred_check_branch
          %177 = sbr.rel (%p175) target = $region16
        $region15: #{tpu_custom_call.1} parent=11 // pred_region
          %179 = vsyncadd [#allocation6], 0
          %s180 = sshll.u32 %s2, 4
          %s181 = int_to_ptr.hbm [resolvable:$true] %s180
          %s182 = sshll.u32 [#allocation7], 4
          %s183 = int_to_ptr.vmem [resolvable:$true] %s182
          %188 = dma.hbm_to_vmem [thread:$0]  %s181, 4096, %s183, [#allocation6], 128, 128, 8
        $region16: #{tpu_custom_call.1} parent=11 // pred_fallthru
          _
        // Predicated region
        $region17: #{tpu_custom_call.1} parent=11 // pred_check
          %p189 = pneg %p132
        $region18: #{tpu_custom_call.1} parent=11 // pred_check_branch
          %191 = sbr.rel (%p189) target = $region20
        $region19: #{tpu_custom_call.1} parent=11 // pred_region
          %193 = vsyncadd [#allocation9], 0
          %s194 = sshll.u32 %s3, 4
          %s195 = int_to_ptr.hbm [resolvable:$true] %s194
          %s196 = sshll.u32 [#allocation8], 4
          %s197 = int_to_ptr.vmem [resolvable:$true] %s196
          %202 = dma.hbm_to_vmem [thread:$0]  %s195, 1280, %s197, [#allocation9], 128, 128, 8
        $region20: #{tpu_custom_call.1} parent=11 // pred_fallthru
          _
      $region12: #{tpu_custom_call.1} parent=5 // pred_fallthru
        _
      %p203 = scmp.lt.s32.totalorder %s20, 2
      // Predicated region
      $region21: #{tpu_custom_call.1} parent=5 // pred_check
        %p204 = pneg %p203
      $region22: #{tpu_custom_call.1} parent=5 // pred_check_branch
        %206 = sbr.rel (%p204) target = $region24
      $region23: #{tpu_custom_call.1} parent=5 // pred_region
        // Predicated region
        $region25: #{tpu_custom_call.1} parent=23 // pred_check
          %p207 = pneg %p54
        $region26: #{tpu_custom_call.1} parent=23 // pred_check_branch
          %209 = sbr.rel (%p207) target = $region28
        $region27: #{tpu_custom_call.1} parent=23 // pred_region
          %s210 = sand.u32 %s44, 1
          %s211 = scalar_lea.sflag [#allocation3], %s210
          %s212 = sand.u32 %s44, 1
          %s213 = smul.addr %s212, 32
          %s214 = scalar_lea.vmem [#allocation2], %s213
          %216 = vsyncadd %s211, 0
          %s217 = smul.addr %s27, 16
          %s218 = sadd.s32 %s28, %s217
          %s219 = smul.addr %s218, 4
          %s220 = scalar_lea.hbm %s0, %s219
          %s221 = sshll.u32 %s220, 4
          %s222 = int_to_ptr.hbm [resolvable:$true] %s221
          %s223 = sshll.u32 %s214, 4
          %s224 = int_to_ptr.vmem [resolvable:$true] %s223
          %229 = dma.hbm_to_vmem [thread:$0]  %s222, 512, %s224, %s211, 128, 64, 4
        $region28: #{tpu_custom_call.1} parent=23 // pred_fallthru
          _
        // Predicated region
        $region29: #{tpu_custom_call.1} parent=23 // pred_check
          %p230 = pneg %p84
        $region30: #{tpu_custom_call.1} parent=23 // pred_check_branch
          %232 = sbr.rel (%p230) target = $region32
        $region31: #{tpu_custom_call.1} parent=23 // pred_region
          %s233 = sand.u32 %s20, 1
          %s234 = scalar_lea.sflag [#allocation6], %s233
          %s235 = sand.u32 %s74, 1
          %s236 = smul.addr %s235, 32
          %s237 = scalar_lea.vmem [#allocation5], %s236
          %s238 = sadd.s32 %s28, 1
          %240 = vsyncadd %s234, 0
          %s241 = smul.addr %s27, 16
          %s242 = sadd.s32 %s238, %s241
          %s243 = smul.addr %s242, 4
          %s244 = scalar_lea.hbm %s1, %s243
          %s245 = sshll.u32 %s244, 4
          %s246 = int_to_ptr.hbm [resolvable:$true] %s245
          %s247 = sshll.u32 %s237, 4
          %s248 = int_to_ptr.vmem [resolvable:$true] %s247
          %253 = dma.hbm_to_vmem [thread:$0]  %s246, 512, %s248, %s234, 128, 64, 4
        $region32: #{tpu_custom_call.1} parent=23 // pred_fallthru
          _
      $region24: #{tpu_custom_call.1} parent=5 // pred_fallthru
        _
      %p254 = scmp.le.s32.totalorder 1, %s20
      %p255 = scmp.lt.s32.totalorder %s20, 3
      %p256 = pnand %p254, %p255
      %p257 = pneg %p256
      // Predicated region
      $region33: #{tpu_custom_call.1} parent=5 // pred_check
        _
      $region34: #{tpu_custom_call.1} parent=5 // pred_check_branch
        %259 = sbr.rel (%p256) target = $region36
      $region35: #{tpu_custom_call.1} parent=5 // pred_region
        %s260 = ssub.s32 %s20, 1
        %s261 = sand.u32 %s47, 1
        %s262 = scalar_lea.sflag [#allocation3], %s261
        %s263 = sand.u32 %s47, 1
        %s264 = smul.addr %s263, 32
        %s265 = scalar_lea.vmem [#allocation2], %s264
        // Predicated region
        $region37: #{tpu_custom_call.1} parent=35 // pred_check
          %p266 = pneg %p60
        $region38: #{tpu_custom_call.1} parent=35 // pred_check_branch
          %268 = sbr.rel (%p266) target = $region40
        $region39: #{tpu_custom_call.1} parent=35 // pred_region
          %270 = dma.done %s262, 512
        $region40: #{tpu_custom_call.1} parent=35 // pred_fallthru
          _
        %s271 = sand.u32 %s25, 1
        %s272 = scalar_lea.sflag [#allocation6], %s271
        %s273 = sand.u32 %s77, 1
        %s274 = smul.addr %s273, 32
        %s275 = scalar_lea.vmem [#allocation5], %s274
        // Predicated region
        $region41: #{tpu_custom_call.1} parent=35 // pred_check
          %p276 = pneg %p90
        $region42: #{tpu_custom_call.1} parent=35 // pred_check_branch
          %278 = sbr.rel (%p276) target = $region44
        $region43: #{tpu_custom_call.1} parent=35 // pred_region
          %280 = dma.done %s272, 512
        $region44: #{tpu_custom_call.1} parent=35 // pred_fallthru
          _
        // Predicated region
        $region45: #{tpu_custom_call.1} parent=35 // pred_check
          %p281 = pneg %p111
        $region46: #{tpu_custom_call.1} parent=35 // pred_check_branch
          %283 = sbr.rel (%p281) target = $region48
        $region47: #{tpu_custom_call.1} parent=35 // pred_region
          %285 = dma.done [#allocation6], 4096
        $region48: #{tpu_custom_call.1} parent=35 // pred_fallthru
          _
        // Predicated region
        $region49: #{tpu_custom_call.1} parent=35 // pred_check
          %p286 = pneg %p132
        $region50: #{tpu_custom_call.1} parent=35 // pred_check_branch
          %288 = sbr.rel (%p286) target = $region52
        $region51: #{tpu_custom_call.1} parent=35 // pred_region
          %290 = dma.done [#allocation9], 1280
        $region52: #{tpu_custom_call.1} parent=35 // pred_fallthru
          _
        %s291 = sand.u32 %s47, 1
        %s292 = scalar_lea.sflag [#allocation3], %s291
        %s293 = sand.u32 %s47, 1
        %s294 = smul.addr %s293, 32
        %s295 = scalar_lea.vmem [#allocation2], %s294
        %p296 = pneg %p60
        %p297 = pneg %p57
        %s298 = sand.u32 %s25, 1
        %s299 = scalar_lea.sflag [#allocation6], %s298
        %s300 = sand.u32 %s77, 1
        %s301 = smul.addr %s300, 32
        %s302 = scalar_lea.vmem [#allocation5], %s301
        %p303 = pneg %p90
        %p304 = pneg %p87
        %p305 = pneg %p111
        %p306 = pneg %p108
        %p307 = pneg %p132
        %p308 = pneg %p129
        %p309 = pneg %p160
        %p310 = pneg %p157
        %s311 = sand.u32 %s147, 1
        %s312 = scalar_lea.sflag [#allocation4], %s311
        %s313 = sand.u32 %s147, 1
        %s314 = smul.addr %s313, 80
        %s315 = scalar_lea.vmem [#allocation10], %s314
        %s316 = sadd.s32 %s30, 1
        %v318 = vld [vmem:[%s265] sm:$0xf]
        %v319 = vld [vmem:[%s265 + $0x4] sm:$0xf]
        %v320 = vld [vmem:[%s265 + $0x8] sm:$0xf]
        %v321 = vld [vmem:[%s265 + $0xc] sm:$0xf]
        %v322 = vld [vmem:[%s265 + $0x10] sm:$0xf]
        %v323 = vld [vmem:[%s265 + $0x14] sm:$0xf]
        %v324 = vld [vmem:[%s265 + $0x18] sm:$0xf]
        %v325 = vld [vmem:[%s265 + $0x1c] sm:$0xf]
        %v326 = vld [vmem:[%s275] sm:$0xf]
        %v327 = vld [vmem:[%s275 + $0x4] sm:$0xf]
        %v328 = vld [vmem:[%s275 + $0x8] sm:$0xf]
        %v329 = vld [vmem:[%s275 + $0xc] sm:$0xf]
        %v330 = vld [vmem:[%s275 + $0x10] sm:$0xf]
        %v331 = vld [vmem:[%s275 + $0x14] sm:$0xf]
        %v332 = vld [vmem:[%s275 + $0x18] sm:$0xf]
        %v333 = vld [vmem:[%s275 + $0x1c] sm:$0xf]
        %v342 = vunpack.c.l.b16 %v318
        %v343 = vunpack.c.l.b16 %v319
        %v344 = vunpack.c.l.b16 %v320
        %v345 = vunpack.c.l.b16 %v321
        %v346 = vunpack.c.l.b16 %v322
        %v347 = vunpack.c.l.b16 %v323
        %v348 = vunpack.c.l.b16 %v324
        %v349 = vunpack.c.l.b16 %v325
        %v350 = vpack.c.b16 %v343, %v342
        %v351 = vpack.c.b16 %v345, %v344
        %v352 = vpack.c.b16 %v347, %v346
        %v353 = vpack.c.b16 %v349, %v348
        %v366 = vunpack.c.l.b16 %v326
        %v367 = vunpack.c.l.b16 %v327
        %v368 = vunpack.c.l.b16 %v328
        %v369 = vunpack.c.l.b16 %v329
        %v370 = vunpack.c.l.b16 %v330
        %v371 = vunpack.c.l.b16 %v331
        %v372 = vunpack.c.l.b16 %v332
        %v373 = vunpack.c.l.b16 %v333
        %v374 = vpack.c.b16 %v367, %v366
        %v375 = vpack.c.b16 %v369, %v368
        %v376 = vpack.c.b16 %v371, %v370
        %v377 = vpack.c.b16 %v373, %v372
        %v378 = vld [vmem:[#allocation7] sm:$0xff]
        %v379 = vld [vmem:[#allocation7 + $0x8] sm:$0xff]
        %v380 = vld [vmem:[#allocation7 + $0x10] sm:$0xff]
        %v381 = vld [vmem:[#allocation7 + $0x18] sm:$0xff]
        %v382 = vld [vmem:[#allocation7 + $0x20] sm:$0xff]
        %v383 = vld [vmem:[#allocation7 + $0x28] sm:$0xff]
        %v384 = vld [vmem:[#allocation7 + $0x30] sm:$0xff]
        %v385 = vld [vmem:[#allocation7 + $0x38] sm:$0xff]
        %v386 = vld [vmem:[#allocation7 + $0x40] sm:$0xff]
        %v387 = vld [vmem:[#allocation7 + $0x48] sm:$0xff]
        %v388 = vld [vmem:[#allocation7 + $0x50] sm:$0xff]
        %v389 = vld [vmem:[#allocation7 + $0x58] sm:$0xff]
        %v390 = vld [vmem:[#allocation7 + $0x60] sm:$0xff]
        %v391 = vld [vmem:[#allocation7 + $0x68] sm:$0xff]
        %v392 = vld [vmem:[#allocation7 + $0x70] sm:$0xff]
        %v393 = vld [vmem:[#allocation7 + $0x78] sm:$0xff]
        %v394 = vld [vmem:[#allocation7 + $0x80] sm:$0xff]
        %v395 = vld [vmem:[#allocation7 + $0x88] sm:$0xff]
        %v396 = vld [vmem:[#allocation7 + $0x90] sm:$0xff]
        %v397 = vld [vmem:[#allocation7 + $0x98] sm:$0xff]
        %v398 = vld [vmem:[#allocation7 + $0xa0] sm:$0xff]
        %v399 = vld [vmem:[#allocation7 + $0xa8] sm:$0xff]
        %v400 = vld [vmem:[#allocation7 + $0xb0] sm:$0xff]
        %v401 = vld [vmem:[#allocation7 + $0xb8] sm:$0xff]
        %v402 = vld [vmem:[#allocation7 + $0xc0] sm:$0xff]
        %v403 = vld [vmem:[#allocation7 + $0xc8] sm:$0xff]
        %v404 = vld [vmem:[#allocation7 + $0xd0] sm:$0xff]
        %v405 = vld [vmem:[#allocation7 + $0xd8] sm:$0xff]
        %v406 = vld [vmem:[#allocation7 + $0xe0] sm:$0xff]
        %v407 = vld [vmem:[#allocation7 + $0xe8] sm:$0xff]
        %v408 = vld [vmem:[#allocation7 + $0xf0] sm:$0xff]
        %v409 = vld [vmem:[#allocation7 + $0xf8] sm:$0xff]
        %v442 = vunpack.c.l.b16 %v378
        %v443 = vunpack.c.l.b16 %v379
        %v444 = vunpack.c.l.b16 %v380
        %v445 = vunpack.c.l.b16 %v381
        %v446 = vunpack.c.l.b16 %v382
        %v447 = vunpack.c.l.b16 %v383
        %v448 = vunpack.c.l.b16 %v384
        %v449 = vunpack.c.l.b16 %v385
        %v450 = vunpack.c.l.b16 %v386
        %v451 = vunpack.c.l.b16 %v387
        %v452 = vunpack.c.l.b16 %v388
        %v453 = vunpack.c.l.b16 %v389
        %v454 = vunpack.c.l.b16 %v390
        %v455 = vunpack.c.l.b16 %v391
        %v456 = vunpack.c.l.b16 %v392
        %v457 = vunpack.c.l.b16 %v393
        %v458 = vunpack.c.l.b16 %v394
        %v459 = vunpack.c.l.b16 %v395
        %v460 = vunpack.c.l.b16 %v396
        %v461 = vunpack.c.l.b16 %v397
        %v462 = vunpack.c.l.b16 %v398
        %v463 = vunpack.c.l.b16 %v399
        %v464 = vunpack.c.l.b16 %v400
        %v465 = vunpack.c.l.b16 %v401
        %v466 = vunpack.c.l.b16 %v402
        %v467 = vunpack.c.l.b16 %v403
        %v468 = vunpack.c.l.b16 %v404
        %v469 = vunpack.c.l.b16 %v405
        %v470 = vunpack.c.l.b16 %v406
        %v471 = vunpack.c.l.b16 %v407
        %v472 = vunpack.c.l.b16 %v408
        %v473 = vunpack.c.l.b16 %v409
        %v474 = vpack.c.b16 %v443, %v442
        %v475 = vpack.c.b16 %v445, %v444
        %v476 = vpack.c.b16 %v447, %v446
        %v477 = vpack.c.b16 %v449, %v448
        %v478 = vpack.c.b16 %v451, %v450
        %v479 = vpack.c.b16 %v453, %v452
        %v480 = vpack.c.b16 %v455, %v454
        %v481 = vpack.c.b16 %v457, %v456
        %v482 = vpack.c.b16 %v459, %v458
        %v483 = vpack.c.b16 %v461, %v460
        %v484 = vpack.c.b16 %v463, %v462
        %v485 = vpack.c.b16 %v465, %v464
        %v486 = vpack.c.b16 %v467, %v466
        %v487 = vpack.c.b16 %v469, %v468
        %v488 = vpack.c.b16 %v471, %v470
        %v489 = vpack.c.b16 %v473, %v472
        %490 = vrot.lane.b32.xlu0 %v474, 64
        %v491 = vpop.permute.xlu0 %490
        %492 = vrot.lane.b32.xlu0 %v475, 64
        %v493 = vpop.permute.xlu0 %492
        %494 = vrot.lane.b32.xlu0 %v476, 64
        %v495 = vpop.permute.xlu0 %494
        %496 = vrot.lane.b32.xlu0 %v477, 64
        %v497 = vpop.permute.xlu0 %496
        %498 = vrot.lane.b32.xlu0 %v478, 64
        %v499 = vpop.permute.xlu0 %498
        %500 = vrot.lane.b32.xlu0 %v479, 64
        %v501 = vpop.permute.xlu0 %500
        %502 = vrot.lane.b32.xlu0 %v480, 64
        %v503 = vpop.permute.xlu0 %502
        %504 = vrot.lane.b32.xlu0 %v481, 64
        %v505 = vpop.permute.xlu0 %504
        %506 = vrot.lane.b32.xlu0 %v482, 64
        %v507 = vpop.permute.xlu0 %506
        %508 = vrot.lane.b32.xlu0 %v483, 64
        %v509 = vpop.permute.xlu0 %508
        %510 = vrot.lane.b32.xlu0 %v484, 64
        %v511 = vpop.permute.xlu0 %510
        %512 = vrot.lane.b32.xlu0 %v485, 64
        %v513 = vpop.permute.xlu0 %512
        %514 = vrot.lane.b32.xlu0 %v486, 64
        %v515 = vpop.permute.xlu0 %514
        %516 = vrot.lane.b32.xlu0 %v487, 64
        %v517 = vpop.permute.xlu0 %516
        %518 = vrot.lane.b32.xlu0 %v488, 64
        %v519 = vpop.permute.xlu0 %518
        %520 = vrot.lane.b32.xlu0 %v489, 64
        %v521 = vpop.permute.xlu0 %520
        %522 = vrot.lane.b32.xlu0 %v350, 127
        %v523 = vpop.permute.xlu0 %522
        %524 = vrot.lane.b32.xlu0 %v374, 127
        %v525 = vpop.permute.xlu0 %524
        %526 = vrot.lane.b32.xlu0 %v351, 127
        %v527 = vpop.permute.xlu0 %526
        %528 = vrot.lane.b32.xlu0 %v375, 127
        %v529 = vpop.permute.xlu0 %528
        %530 = vrot.lane.b32.xlu0 %v352, 127
        %v531 = vpop.permute.xlu0 %530
        %532 = vrot.lane.b32.xlu0 %v376, 127
        %v533 = vpop.permute.xlu0 %532
        %534 = vrot.lane.b32.xlu0 %v353, 127
        %v535 = vpop.permute.xlu0 %534
        %536 = vrot.lane.b32.xlu0 %v377, 127
        %v537 = vpop.permute.xlu0 %536
        %vm538 = vcmask 1039360
        %v539 = vsel %vm538, %v523, %v525
        %v540 = vsel %vm538, %v527, %v529
        %v541 = vsel %vm538, %v531, %v533
        %v542 = vsel %vm538, %v535, %v537
        %vm547 = vcmask 523264
        %v549 = vsel %vm547, %v491, 0
        %v552 = vsel %vm547, %v493, 0
        %v555 = vsel %vm547, %v495, 0
        %v558 = vsel %vm547, %v497, 0
        %v561 = vsel %vm547, %v499, 0
        %v564 = vsel %vm547, %v501, 0
        %v567 = vsel %vm547, %v503, 0
        %v570 = vsel %vm547, %v505, 0
        %v573 = vsel %vm547, %v507, 0
        %v576 = vsel %vm547, %v509, 0
        %v579 = vsel %vm547, %v511, 0
        %v582 = vsel %vm547, %v513, 0
        %v585 = vsel %vm547, %v515, 0
        %v588 = vsel %vm547, %v517, 0
        %v591 = vsel %vm547, %v519, 0
        %v594 = vsel %vm547, %v521, 0
        %596 = vmatpush.bf16.msra.mxu0 0
        %597 = vmatpush.bf16.msra.mxu0 0
        %598 = vmatpush.bf16.msra.mxu0 0
        %599 = vmatpush.bf16.msra.mxu0 0
        %600 = vmatpush.bf16.msra.mxu0 %v542
        %601 = vmatpush.bf16.msra.mxu0 %v541
        %602 = vmatpush.bf16.msra.mxu0 %v540
        %603 = vmatpush.bf16.msra.mxu0 %v539
        %604 = vmatmul.bf16.gmra.mxu0 %v549
        %v605 = vpop.f32.mrf.mxu0
        %v606 = vadd.f32 0.0, %v605
        %v607 = vpop.f32.mrf.mxu0
        %v608 = vadd.f32 0.0, %v607
        %609 = vmatmul.bf16.gmra.mxu0 %v552
        %v610 = vpop.f32.mrf.mxu0
        %v611 = vadd.f32 0.0, %v610
        %v612 = vpop.f32.mrf.mxu0
        %v613 = vadd.f32 0.0, %v612
        %614 = vmatmul.bf16.gmra.mxu0 %v555
        %v615 = vpop.f32.mrf.mxu0
        %v616 = vadd.f32 0.0, %v615
        %v617 = vpop.f32.mrf.mxu0
        %v618 = vadd.f32 0.0, %v617
        %619 = vmatmul.bf16.gmra.mxu0 %v558
        %v620 = vpop.f32.mrf.mxu0
        %v621 = vadd.f32 0.0, %v620
        %v622 = vpop.f32.mrf.mxu0
        %v623 = vadd.f32 0.0, %v622
        %624 = vmatmul.bf16.gmra.mxu0 %v561
        %v625 = vpop.f32.mrf.mxu0
        %v626 = vadd.f32 0.0, %v625
        %v627 = vpop.f32.mrf.mxu0
        %v628 = vadd.f32 0.0, %v627
        %629 = vmatmul.bf16.gmra.mxu0 %v564
        %v630 = vpop.f32.mrf.mxu0
        %v631 = vadd.f32 0.0, %v630
        %v632 = vpop.f32.mrf.mxu0
        %v633 = vadd.f32 0.0, %v632
        %634 = vmatmul.bf16.gmra.mxu0 %v567
        %v635 = vpop.f32.mrf.mxu0
        %v636 = vadd.f32 0.0, %v635
        %v637 = vpop.f32.mrf.mxu0
        %v638 = vadd.f32 0.0, %v637
        %639 = vmatmul.bf16.gmra.mxu0 %v570
        %v640 = vpop.f32.mrf.mxu0
        %v641 = vadd.f32 0.0, %v640
        %v642 = vpop.f32.mrf.mxu0
        %v643 = vadd.f32 0.0, %v642
        %644 = vmatmul.bf16.gmra.mxu0 %v573
        %v645 = vpop.f32.mrf.mxu0
        %v646 = vadd.f32 0.0, %v645
        %v647 = vpop.f32.mrf.mxu0
        %v648 = vadd.f32 0.0, %v647
        %649 = vmatmul.bf16.gmra.mxu0 %v576
        %v650 = vpop.f32.mrf.mxu0
        %v651 = vadd.f32 0.0, %v650
        %v652 = vpop.f32.mrf.mxu0
        %v653 = vadd.f32 0.0, %v652
        %654 = vmatmul.bf16.gmra.mxu0 %v579
        %v655 = vpop.f32.mrf.mxu0
        %v656 = vadd.f32 0.0, %v655
        %v657 = vpop.f32.mrf.mxu0
        %v658 = vadd.f32 0.0, %v657
        %659 = vmatmul.bf16.gmra.mxu0 %v582
        %v660 = vpop.f32.mrf.mxu0
        %v661 = vadd.f32 0.0, %v660
        %v662 = vpop.f32.mrf.mxu0
        %v663 = vadd.f32 0.0, %v662
        %664 = vmatmul.bf16.gmra.mxu0 %v585
        %v665 = vpop.f32.mrf.mxu0
        %v666 = vadd.f32 0.0, %v665
        %v667 = vpop.f32.mrf.mxu0
        %v668 = vadd.f32 0.0, %v667
        %669 = vmatmul.bf16.gmra.mxu0 %v588
        %v670 = vpop.f32.mrf.mxu0
        %v671 = vadd.f32 0.0, %v670
        %v672 = vpop.f32.mrf.mxu0
        %v673 = vadd.f32 0.0, %v672
        %674 = vmatmul.bf16.gmra.mxu0 %v591
        %v675 = vpop.f32.mrf.mxu0
        %v676 = vadd.f32 0.0, %v675
        %v677 = vpop.f32.mrf.mxu0
        %v678 = vadd.f32 0.0, %v677
        %679 = vmatmul.bf16.gmra.mxu0 %v594
        %v680 = vpop.f32.mrf.mxu0
        %v681 = vadd.f32 0.0, %v680
        %v682 = vpop.f32.mrf.mxu0
        %v683 = vadd.f32 0.0, %v682
        %684 = vdwg.mxu0
        %v686 = vsel %vm547, %v474, 0
        %v689 = vsel %vm547, %v475, 0
        %v692 = vsel %vm547, %v476, 0
        %v695 = vsel %vm547, %v477, 0
        %v698 = vsel %vm547, %v478, 0
        %v701 = vsel %vm547, %v479, 0
        %v704 = vsel %vm547, %v480, 0
        %v707 = vsel %vm547, %v481, 0
        %v710 = vsel %vm547, %v482, 0
        %v713 = vsel %vm547, %v483, 0
        %v716 = vsel %vm547, %v484, 0
        %v719 = vsel %vm547, %v485, 0
        %v722 = vsel %vm547, %v486, 0
        %v725 = vsel %vm547, %v487, 0
        %v728 = vsel %vm547, %v488, 0
        %v731 = vsel %vm547, %v489, 0
        %733 = vmatpush.bf16.msra.mxu0 0
        %734 = vmatpush.bf16.msra.mxu0 0
        %735 = vmatpush.bf16.msra.mxu0 0
        %736 = vmatpush.bf16.msra.mxu0 0
        %737 = vmatpush.bf16.msra.mxu0 %v353
        %738 = vmatpush.bf16.msra.mxu0 %v352
        %739 = vmatpush.bf16.msra.mxu0 %v351
        %740 = vmatpush.bf16.msra.mxu0 %v350
        %741 = vmatmul.bf16.gmra.mxu0 %v686
        %v742 = vpop.f32.mrf.mxu0
        %v743 = vadd.f32 %v606, %v742
        %v744 = vpop.f32.mrf.mxu0
        %v745 = vadd.f32 %v608, %v744
        %746 = vmatmul.bf16.gmra.mxu0 %v689
        %v747 = vpop.f32.mrf.mxu0
        %v748 = vadd.f32 %v611, %v747
        %v749 = vpop.f32.mrf.mxu0
        %v750 = vadd.f32 %v613, %v749
        %751 = vmatmul.bf16.gmra.mxu0 %v692
        %v752 = vpop.f32.mrf.mxu0
        %v753 = vadd.f32 %v616, %v752
        %v754 = vpop.f32.mrf.mxu0
        %v755 = vadd.f32 %v618, %v754
        %756 = vmatmul.bf16.gmra.mxu0 %v695
        %v757 = vpop.f32.mrf.mxu0
        %v758 = vadd.f32 %v621, %v757
        %v759 = vpop.f32.mrf.mxu0
        %v760 = vadd.f32 %v623, %v759
        %761 = vmatmul.bf16.gmra.mxu0 %v698
        %v762 = vpop.f32.mrf.mxu0
        %v763 = vadd.f32 %v626, %v762
        %v764 = vpop.f32.mrf.mxu0
        %v765 = vadd.f32 %v628, %v764
        %766 = vmatmul.bf16.gmra.mxu0 %v701
        %v767 = vpop.f32.mrf.mxu0
        %v768 = vadd.f32 %v631, %v767
        %v769 = vpop.f32.mrf.mxu0
        %v770 = vadd.f32 %v633, %v769
        %771 = vmatmul.bf16.gmra.mxu0 %v704
        %v772 = vpop.f32.mrf.mxu0
        %v773 = vadd.f32 %v636, %v772
        %v774 = vpop.f32.mrf.mxu0
        %v775 = vadd.f32 %v638, %v774
        %776 = vmatmul.bf16.gmra.mxu0 %v707
        %v777 = vpop.f32.mrf.mxu0
        %v778 = vadd.f32 %v641, %v777
        %v779 = vpop.f32.mrf.mxu0
        %v780 = vadd.f32 %v643, %v779
        %781 = vmatmul.bf16.gmra.mxu0 %v710
        %v782 = vpop.f32.mrf.mxu0
        %v783 = vadd.f32 %v646, %v782
        %v784 = vpop.f32.mrf.mxu0
        %v785 = vadd.f32 %v648, %v784
        %786 = vmatmul.bf16.gmra.mxu0 %v713
        %v787 = vpop.f32.mrf.mxu0
        %v788 = vadd.f32 %v651, %v787
        %v789 = vpop.f32.mrf.mxu0
        %v790 = vadd.f32 %v653, %v789
        %791 = vmatmul.bf16.gmra.mxu0 %v716
        %v792 = vpop.f32.mrf.mxu0
        %v793 = vadd.f32 %v656, %v792
        %v794 = vpop.f32.mrf.mxu0
        %v795 = vadd.f32 %v658, %v794
        %796 = vmatmul.bf16.gmra.mxu0 %v719
        %v797 = vpop.f32.mrf.mxu0
        %v798 = vadd.f32 %v661, %v797
        %v799 = vpop.f32.mrf.mxu0
        %v800 = vadd.f32 %v663, %v799
        %801 = vmatmul.bf16.gmra.mxu0 %v722
        %v802 = vpop.f32.mrf.mxu0
        %v803 = vadd.f32 %v666, %v802
        %v804 = vpop.f32.mrf.mxu0
        %v805 = vadd.f32 %v668, %v804
        %806 = vmatmul.bf16.gmra.mxu0 %v725
        %v807 = vpop.f32.mrf.mxu0
        %v808 = vadd.f32 %v671, %v807
        %v809 = vpop.f32.mrf.mxu0
        %v810 = vadd.f32 %v673, %v809
        %811 = vmatmul.bf16.gmra.mxu0 %v728
        %v812 = vpop.f32.mrf.mxu0
        %v813 = vadd.f32 %v676, %v812
        %v814 = vpop.f32.mrf.mxu0
        %v815 = vadd.f32 %v678, %v814
        %816 = vmatmul.bf16.gmra.mxu0 %v731
        %v817 = vpop.f32.mrf.mxu0
        %v818 = vadd.f32 %v681, %v817
        %v819 = vpop.f32.mrf.mxu0
        %v820 = vadd.f32 %v683, %v819
        %821 = vdwg.mxu0
        %v822 = vunpack.c.h.b16 %v378
        %v823 = vunpack.c.h.b16 %v379
        %v824 = vunpack.c.h.b16 %v380
        %v825 = vunpack.c.h.b16 %v381
        %v826 = vunpack.c.h.b16 %v382
        %v827 = vunpack.c.h.b16 %v383
        %v828 = vunpack.c.h.b16 %v384
        %v829 = vunpack.c.h.b16 %v385
        %v830 = vunpack.c.h.b16 %v386
        %v831 = vunpack.c.h.b16 %v387
        %v832 = vunpack.c.h.b16 %v388
        %v833 = vunpack.c.h.b16 %v389
        %v834 = vunpack.c.h.b16 %v390
        %v835 = vunpack.c.h.b16 %v391
        %v836 = vunpack.c.h.b16 %v392
        %v837 = vunpack.c.h.b16 %v393
        %v838 = vunpack.c.h.b16 %v394
        %v839 = vunpack.c.h.b16 %v395
        %v840 = vunpack.c.h.b16 %v396
        %v841 = vunpack.c.h.b16 %v397
        %v842 = vunpack.c.h.b16 %v398
        %v843 = vunpack.c.h.b16 %v399
        %v844 = vunpack.c.h.b16 %v400
        %v845 = vunpack.c.h.b16 %v401
        %v846 = vunpack.c.h.b16 %v402
        %v847 = vunpack.c.h.b16 %v403
        %v848 = vunpack.c.h.b16 %v404
        %v849 = vunpack.c.h.b16 %v405
        %v850 = vunpack.c.h.b16 %v406
        %v851 = vunpack.c.h.b16 %v407
        %v852 = vunpack.c.h.b16 %v408
        %v853 = vunpack.c.h.b16 %v409
        %v854 = vpack.c.b16 %v823, %v822
        %v855 = vpack.c.b16 %v825, %v824
        %v856 = vpack.c.b16 %v827, %v826
        %v857 = vpack.c.b16 %v829, %v828
        %v858 = vpack.c.b16 %v831, %v830
        %v859 = vpack.c.b16 %v833, %v832
        %v860 = vpack.c.b16 %v835, %v834
        %v861 = vpack.c.b16 %v837, %v836
        %v862 = vpack.c.b16 %v839, %v838
        %v863 = vpack.c.b16 %v841, %v840
        %v864 = vpack.c.b16 %v843, %v842
        %v865 = vpack.c.b16 %v845, %v844
        %v866 = vpack.c.b16 %v847, %v846
        %v867 = vpack.c.b16 %v849, %v848
        %v868 = vpack.c.b16 %v851, %v850
        %v869 = vpack.c.b16 %v853, %v852
        %870 = vrot.lane.b32.xlu0 %v350, 126
        %v871 = vpop.permute.xlu0 %870
        %872 = vrot.lane.b32.xlu0 %v374, 126
        %v873 = vpop.permute.xlu0 %872
        %874 = vrot.lane.b32.xlu0 %v351, 126
        %v875 = vpop.permute.xlu0 %874
        %876 = vrot.lane.b32.xlu0 %v375, 126
        %v877 = vpop.permute.xlu0 %876
        %878 = vrot.lane.b32.xlu0 %v352, 126
        %v879 = vpop.permute.xlu0 %878
        %880 = vrot.lane.b32.xlu0 %v376, 126
        %v881 = vpop.permute.xlu0 %880
        %882 = vrot.lane.b32.xlu0 %v353, 126
        %v883 = vpop.permute.xlu0 %882
        %884 = vrot.lane.b32.xlu0 %v377, 126
        %v885 = vpop.permute.xlu0 %884
        %vm886 = vcmask 1031168
        %v887 = vsel %vm886, %v871, %v873
        %v888 = vsel %vm886, %v875, %v877
        %v889 = vsel %vm886, %v879, %v881
        %v890 = vsel %vm886, %v883, %v885
        %v896 = vsel %vm547, %v854, 0
        %v899 = vsel %vm547, %v855, 0
        %v902 = vsel %vm547, %v856, 0
        %v905 = vsel %vm547, %v857, 0
        %v908 = vsel %vm547, %v858, 0
        %v911 = vsel %vm547, %v859, 0
        %v914 = vsel %vm547, %v860, 0
        %v917 = vsel %vm547, %v861, 0
        %v920 = vsel %vm547, %v862, 0
        %v923 = vsel %vm547, %v863, 0
        %v926 = vsel %vm547, %v864, 0
        %v929 = vsel %vm547, %v865, 0
        %v932 = vsel %vm547, %v866, 0
        %v935 = vsel %vm547, %v867, 0
        %v938 = vsel %vm547, %v868, 0
        %v941 = vsel %vm547, %v869, 0
        %943 = vmatpush.bf16.msra.mxu0 0
        %944 = vmatpush.bf16.msra.mxu0 0
        %945 = vmatpush.bf16.msra.mxu0 0
        %946 = vmatpush.bf16.msra.mxu0 0
        %947 = vmatpush.bf16.msra.mxu0 %v890
        %948 = vmatpush.bf16.msra.mxu0 %v889
        %949 = vmatpush.bf16.msra.mxu0 %v888
        %950 = vmatpush.bf16.msra.mxu0 %v887
        %951 = vmatmul.bf16.gmra.mxu0 %v896
        %v952 = vpop.f32.mrf.mxu0
        %v953 = vadd.f32 0.0, %v952
        %v954 = vpop.f32.mrf.mxu0
        %v955 = vadd.f32 0.0, %v954
        %956 = vmatmul.bf16.gmra.mxu0 %v899
        %v957 = vpop.f32.mrf.mxu0
        %v958 = vadd.f32 0.0, %v957
        %v959 = vpop.f32.mrf.mxu0
        %v960 = vadd.f32 0.0, %v959
        %961 = vmatmul.bf16.gmra.mxu0 %v902
        %v962 = vpop.f32.mrf.mxu0
        %v963 = vadd.f32 0.0, %v962
        %v964 = vpop.f32.mrf.mxu0
        %v965 = vadd.f32 0.0, %v964
        %966 = vmatmul.bf16.gmra.mxu0 %v905
        %v967 = vpop.f32.mrf.mxu0
        %v968 = vadd.f32 0.0, %v967
        %v969 = vpop.f32.mrf.mxu0
        %v970 = vadd.f32 0.0, %v969
        %971 = vmatmul.bf16.gmra.mxu0 %v908
        %v972 = vpop.f32.mrf.mxu0
        %v973 = vadd.f32 0.0, %v972
        %v974 = vpop.f32.mrf.mxu0
        %v975 = vadd.f32 0.0, %v974
        %976 = vmatmul.bf16.gmra.mxu0 %v911
        %v977 = vpop.f32.mrf.mxu0
        %v978 = vadd.f32 0.0, %v977
        %v979 = vpop.f32.mrf.mxu0
        %v980 = vadd.f32 0.0, %v979
        %981 = vmatmul.bf16.gmra.mxu0 %v914
        %v982 = vpop.f32.mrf.mxu0
        %v983 = vadd.f32 0.0, %v982
        %v984 = vpop.f32.mrf.mxu0
        %v985 = vadd.f32 0.0, %v984
        %986 = vmatmul.bf16.gmra.mxu0 %v917
        %v987 = vpop.f32.mrf.mxu0
        %v988 = vadd.f32 0.0, %v987
        %v989 = vpop.f32.mrf.mxu0
        %v990 = vadd.f32 0.0, %v989
        %991 = vmatmul.bf16.gmra.mxu0 %v920
        %v992 = vpop.f32.mrf.mxu0
        %v993 = vadd.f32 0.0, %v992
        %v994 = vpop.f32.mrf.mxu0
        %v995 = vadd.f32 0.0, %v994
        %996 = vmatmul.bf16.gmra.mxu0 %v923
        %v997 = vpop.f32.mrf.mxu0
        %v998 = vadd.f32 0.0, %v997
        %v999 = vpop.f32.mrf.mxu0
        %v1000 = vadd.f32 0.0, %v999
        %1001 = vmatmul.bf16.gmra.mxu0 %v926
        %v1002 = vpop.f32.mrf.mxu0
        %v1003 = vadd.f32 0.0, %v1002
        %v1004 = vpop.f32.mrf.mxu0
        %v1005 = vadd.f32 0.0, %v1004
        %1006 = vmatmul.bf16.gmra.mxu0 %v929
        %v1007 = vpop.f32.mrf.mxu0
        %v1008 = vadd.f32 0.0, %v1007
        %v1009 = vpop.f32.mrf.mxu0
        %v1010 = vadd.f32 0.0, %v1009
        %1011 = vmatmul.bf16.gmra.mxu0 %v932
        %v1012 = vpop.f32.mrf.mxu0
        %v1013 = vadd.f32 0.0, %v1012
        %v1014 = vpop.f32.mrf.mxu0
        %v1015 = vadd.f32 0.0, %v1014
        %1016 = vmatmul.bf16.gmra.mxu0 %v935
        %v1017 = vpop.f32.mrf.mxu0
        %v1018 = vadd.f32 0.0, %v1017
        %v1019 = vpop.f32.mrf.mxu0
        %v1020 = vadd.f32 0.0, %v1019
        %1021 = vmatmul.bf16.gmra.mxu0 %v938
        %v1022 = vpop.f32.mrf.mxu0
        %v1023 = vadd.f32 0.0, %v1022
        %v1024 = vpop.f32.mrf.mxu0
        %v1025 = vadd.f32 0.0, %v1024
        %1026 = vmatmul.bf16.gmra.mxu0 %v941
        %v1027 = vpop.f32.mrf.mxu0
        %v1028 = vadd.f32 0.0, %v1027
        %v1029 = vpop.f32.mrf.mxu0
        %v1030 = vadd.f32 0.0, %v1029
        %1031 = vdwg.mxu0
        %v1032 = vadd.f32 %v743, %v953
        %v1033 = vadd.f32 %v745, %v955
        %v1034 = vadd.f32 %v748, %v958
        %v1035 = vadd.f32 %v750, %v960
        %v1036 = vadd.f32 %v753, %v963
        %v1037 = vadd.f32 %v755, %v965
        %v1038 = vadd.f32 %v758, %v968
        %v1039 = vadd.f32 %v760, %v970
        %v1040 = vadd.f32 %v763, %v973
        %v1041 = vadd.f32 %v765, %v975
        %v1042 = vadd.f32 %v768, %v978
        %v1043 = vadd.f32 %v770, %v980
        %v1044 = vadd.f32 %v773, %v983
        %v1045 = vadd.f32 %v775, %v985
        %v1046 = vadd.f32 %v778, %v988
        %v1047 = vadd.f32 %v780, %v990
        %v1048 = vadd.f32 %v783, %v993
        %v1049 = vadd.f32 %v785, %v995
        %v1050 = vadd.f32 %v788, %v998
        %v1051 = vadd.f32 %v790, %v1000
        %v1052 = vadd.f32 %v793, %v1003
        %v1053 = vadd.f32 %v795, %v1005
        %v1054 = vadd.f32 %v798, %v1008
        %v1055 = vadd.f32 %v800, %v1010
        %v1056 = vadd.f32 %v803, %v1013
        %v1057 = vadd.f32 %v805, %v1015
        %v1058 = vadd.f32 %v808, %v1018
        %v1059 = vadd.f32 %v810, %v1020
        %v1060 = vadd.f32 %v813, %v1023
        %v1061 = vadd.f32 %v815, %v1025
        %v1062 = vadd.f32 %v818, %v1028
        %v1063 = vadd.f32 %v820, %v1030
        %1064 = vrot.lane.b32.xlu0 %v854, 64
        %v1065 = vpop.permute.xlu0 %1064
        %1066 = vrot.lane.b32.xlu0 %v855, 64
        %v1067 = vpop.permute.xlu0 %1066
        %1068 = vrot.lane.b32.xlu0 %v856, 64
        %v1069 = vpop.permute.xlu0 %1068
        %1070 = vrot.lane.b32.xlu0 %v857, 64
        %v1071 = vpop.permute.xlu0 %1070
        %1072 = vrot.lane.b32.xlu0 %v858, 64
        %v1073 = vpop.permute.xlu0 %1072
        %1074 = vrot.lane.b32.xlu0 %v859, 64
        %v1075 = vpop.permute.xlu0 %1074
        %1076 = vrot.lane.b32.xlu0 %v860, 64
        %v1077 = vpop.permute.xlu0 %1076
        %1078 = vrot.lane.b32.xlu0 %v861, 64
        %v1079 = vpop.permute.xlu0 %1078
        %1080 = vrot.lane.b32.xlu0 %v862, 64
        %v1081 = vpop.permute.xlu0 %1080
        %1082 = vrot.lane.b32.xlu0 %v863, 64
        %v1083 = vpop.permute.xlu0 %1082
        %1084 = vrot.lane.b32.xlu0 %v864, 64
        %v1085 = vpop.permute.xlu0 %1084
        %1086 = vrot.lane.b32.xlu0 %v865, 64
        %v1087 = vpop.permute.xlu0 %1086
        %1088 = vrot.lane.b32.xlu0 %v866, 64
        %v1089 = vpop.permute.xlu0 %1088
        %1090 = vrot.lane.b32.xlu0 %v867, 64
        %v1091 = vpop.permute.xlu0 %1090
        %1092 = vrot.lane.b32.xlu0 %v868, 64
        %v1093 = vpop.permute.xlu0 %1092
        %1094 = vrot.lane.b32.xlu0 %v869, 64
        %v1095 = vpop.permute.xlu0 %1094
        %1096 = vrot.lane.b32.xlu0 %v350, 125
        %v1097 = vpop.permute.xlu0 %1096
        %1098 = vrot.lane.b32.xlu0 %v374, 125
        %v1099 = vpop.permute.xlu0 %1098
        %1100 = vrot.lane.b32.xlu0 %v351, 125
        %v1101 = vpop.permute.xlu0 %1100
        %1102 = vrot.lane.b32.xlu0 %v375, 125
        %v1103 = vpop.permute.xlu0 %1102
        %1104 = vrot.lane.b32.xlu0 %v352, 125
        %v1105 = vpop.permute.xlu0 %1104
        %1106 = vrot.lane.b32.xlu0 %v376, 125
        %v1107 = vpop.permute.xlu0 %1106
        %1108 = vrot.lane.b32.xlu0 %v353, 125
        %v1109 = vpop.permute.xlu0 %1108
        %1110 = vrot.lane.b32.xlu0 %v377, 125
        %v1111 = vpop.permute.xlu0 %1110
        %vm1112 = vcmask 1022976
        %v1113 = vsel %vm1112, %v1097, %v1099
        %v1114 = vsel %vm1112, %v1101, %v1103
        %v1115 = vsel %vm1112, %v1105, %v1107
        %v1116 = vsel %vm1112, %v1109, %v1111
        %v1122 = vsel %vm547, %v1065, 0
        %v1125 = vsel %vm547, %v1067, 0
        %v1128 = vsel %vm547, %v1069, 0
        %v1131 = vsel %vm547, %v1071, 0
        %v1134 = vsel %vm547, %v1073, 0
        %v1137 = vsel %vm547, %v1075, 0
        %v1140 = vsel %vm547, %v1077, 0
        %v1143 = vsel %vm547, %v1079, 0
        %v1146 = vsel %vm547, %v1081, 0
        %v1149 = vsel %vm547, %v1083, 0
        %v1152 = vsel %vm547, %v1085, 0
        %v1155 = vsel %vm547, %v1087, 0
        %v1158 = vsel %vm547, %v1089, 0
        %v1161 = vsel %vm547, %v1091, 0
        %v1164 = vsel %vm547, %v1093, 0
        %v1167 = vsel %vm547, %v1095, 0
        %1169 = vmatpush.bf16.msra.mxu0 0
        %1170 = vmatpush.bf16.msra.mxu0 0
        %1171 = vmatpush.bf16.msra.mxu0 0
        %1172 = vmatpush.bf16.msra.mxu0 0
        %1173 = vmatpush.bf16.msra.mxu0 %v1116
        %1174 = vmatpush.bf16.msra.mxu0 %v1115
        %1175 = vmatpush.bf16.msra.mxu0 %v1114
        %1176 = vmatpush.bf16.msra.mxu0 %v1113
        %1177 = vmatmul.bf16.gmra.mxu0 %v1122
        %v1178 = vpop.f32.mrf.mxu0
        %v1179 = vadd.f32 0.0, %v1178
        %v1180 = vpop.f32.mrf.mxu0
        %v1181 = vadd.f32 0.0, %v1180
        %1182 = vmatmul.bf16.gmra.mxu0 %v1125
        %v1183 = vpop.f32.mrf.mxu0
        %v1184 = vadd.f32 0.0, %v1183
        %v1185 = vpop.f32.mrf.mxu0
        %v1186 = vadd.f32 0.0, %v1185
        %1187 = vmatmul.bf16.gmra.mxu0 %v1128
        %v1188 = vpop.f32.mrf.mxu0
        %v1189 = vadd.f32 0.0, %v1188
        %v1190 = vpop.f32.mrf.mxu0
        %v1191 = vadd.f32 0.0, %v1190
        %1192 = vmatmul.bf16.gmra.mxu0 %v1131
        %v1193 = vpop.f32.mrf.mxu0
        %v1194 = vadd.f32 0.0, %v1193
        %v1195 = vpop.f32.mrf.mxu0
        %v1196 = vadd.f32 0.0, %v1195
        %1197 = vmatmul.bf16.gmra.mxu0 %v1134
        %v1198 = vpop.f32.mrf.mxu0
        %v1199 = vadd.f32 0.0, %v1198
        %v1200 = vpop.f32.mrf.mxu0
        %v1201 = vadd.f32 0.0, %v1200
        %1202 = vmatmul.bf16.gmra.mxu0 %v1137
        %v1203 = vpop.f32.mrf.mxu0
        %v1204 = vadd.f32 0.0, %v1203
        %v1205 = vpop.f32.mrf.mxu0
        %v1206 = vadd.f32 0.0, %v1205
        %1207 = vmatmul.bf16.gmra.mxu0 %v1140
        %v1208 = vpop.f32.mrf.mxu0
        %v1209 = vadd.f32 0.0, %v1208
        %v1210 = vpop.f32.mrf.mxu0
        %v1211 = vadd.f32 0.0, %v1210
        %1212 = vmatmul.bf16.gmra.mxu0 %v1143
        %v1213 = vpop.f32.mrf.mxu0
        %v1214 = vadd.f32 0.0, %v1213
        %v1215 = vpop.f32.mrf.mxu0
        %v1216 = vadd.f32 0.0, %v1215
        %1217 = vmatmul.bf16.gmra.mxu0 %v1146
        %v1218 = vpop.f32.mrf.mxu0
        %v1219 = vadd.f32 0.0, %v1218
        %v1220 = vpop.f32.mrf.mxu0
        %v1221 = vadd.f32 0.0, %v1220
        %1222 = vmatmul.bf16.gmra.mxu0 %v1149
        %v1223 = vpop.f32.mrf.mxu0
        %v1224 = vadd.f32 0.0, %v1223
        %v1225 = vpop.f32.mrf.mxu0
        %v1226 = vadd.f32 0.0, %v1225
        %1227 = vmatmul.bf16.gmra.mxu0 %v1152
        %v1228 = vpop.f32.mrf.mxu0
        %v1229 = vadd.f32 0.0, %v1228
        %v1230 = vpop.f32.mrf.mxu0
        %v1231 = vadd.f32 0.0, %v1230
        %1232 = vmatmul.bf16.gmra.mxu0 %v1155
        %v1233 = vpop.f32.mrf.mxu0
        %v1234 = vadd.f32 0.0, %v1233
        %v1235 = vpop.f32.mrf.mxu0
        %v1236 = vadd.f32 0.0, %v1235
        %1237 = vmatmul.bf16.gmra.mxu0 %v1158
        %v1238 = vpop.f32.mrf.mxu0
        %v1239 = vadd.f32 0.0, %v1238
        %v1240 = vpop.f32.mrf.mxu0
        %v1241 = vadd.f32 0.0, %v1240
        %1242 = vmatmul.bf16.gmra.mxu0 %v1161
        %v1243 = vpop.f32.mrf.mxu0
        %v1244 = vadd.f32 0.0, %v1243
        %v1245 = vpop.f32.mrf.mxu0
        %v1246 = vadd.f32 0.0, %v1245
        %1247 = vmatmul.bf16.gmra.mxu0 %v1164
        %v1248 = vpop.f32.mrf.mxu0
        %v1249 = vadd.f32 0.0, %v1248
        %v1250 = vpop.f32.mrf.mxu0
        %v1251 = vadd.f32 0.0, %v1250
        %1252 = vmatmul.bf16.gmra.mxu0 %v1167
        %v1253 = vpop.f32.mrf.mxu0
        %v1254 = vadd.f32 0.0, %v1253
        %v1255 = vpop.f32.mrf.mxu0
        %v1256 = vadd.f32 0.0, %v1255
        %1257 = vdwg.mxu0
        %v1258 = vadd.f32 %v1032, %v1179
        %v1259 = vadd.f32 %v1033, %v1181
        %v1260 = vadd.f32 %v1034, %v1184
        %v1261 = vadd.f32 %v1035, %v1186
        %v1262 = vadd.f32 %v1036, %v1189
        %v1263 = vadd.f32 %v1037, %v1191
        %v1264 = vadd.f32 %v1038, %v1194
        %v1265 = vadd.f32 %v1039, %v1196
        %v1266 = vadd.f32 %v1040, %v1199
        %v1267 = vadd.f32 %v1041, %v1201
        %v1268 = vadd.f32 %v1042, %v1204
        %v1269 = vadd.f32 %v1043, %v1206
        %v1270 = vadd.f32 %v1044, %v1209
        %v1271 = vadd.f32 %v1045, %v1211
        %v1272 = vadd.f32 %v1046, %v1214
        %v1273 = vadd.f32 %v1047, %v1216
        %v1274 = vadd.f32 %v1048, %v1219
        %v1275 = vadd.f32 %v1049, %v1221
        %v1276 = vadd.f32 %v1050, %v1224
        %v1277 = vadd.f32 %v1051, %v1226
        %v1278 = vadd.f32 %v1052, %v1229
        %v1279 = vadd.f32 %v1053, %v1231
        %v1280 = vadd.f32 %v1054, %v1234
        %v1281 = vadd.f32 %v1055, %v1236
        %v1282 = vadd.f32 %v1056, %v1239
        %v1283 = vadd.f32 %v1057, %v1241
        %v1284 = vadd.f32 %v1058, %v1244
        %v1285 = vadd.f32 %v1059, %v1246
        %v1286 = vadd.f32 %v1060, %v1249
        %v1287 = vadd.f32 %v1061, %v1251
        %v1288 = vadd.f32 %v1062, %v1254
        %v1289 = vadd.f32 %v1063, %v1256
        %v1290 = vmul.f32 %v1258, %v1258
        %v1291 = vmul.f32 %v1259, %v1259
        %v1292 = vmul.f32 %v1260, %v1260
        %v1293 = vmul.f32 %v1261, %v1261
        %v1294 = vmul.f32 %v1262, %v1262
        %v1295 = vmul.f32 %v1263, %v1263
        %v1296 = vmul.f32 %v1264, %v1264
        %v1297 = vmul.f32 %v1265, %v1265
        %v1298 = vmul.f32 %v1266, %v1266
        %v1299 = vmul.f32 %v1267, %v1267
        %v1300 = vmul.f32 %v1268, %v1268
        %v1301 = vmul.f32 %v1269, %v1269
        %v1302 = vmul.f32 %v1270, %v1270
        %v1303 = vmul.f32 %v1271, %v1271
        %v1304 = vmul.f32 %v1272, %v1272
        %v1305 = vmul.f32 %v1273, %v1273
        %v1306 = vmul.f32 %v1274, %v1274
        %v1307 = vmul.f32 %v1275, %v1275
        %v1308 = vmul.f32 %v1276, %v1276
        %v1309 = vmul.f32 %v1277, %v1277
        %v1310 = vmul.f32 %v1278, %v1278
        %v1311 = vmul.f32 %v1279, %v1279
        %v1312 = vmul.f32 %v1280, %v1280
        %v1313 = vmul.f32 %v1281, %v1281
        %v1314 = vmul.f32 %v1282, %v1282
        %v1315 = vmul.f32 %v1283, %v1283
        %v1316 = vmul.f32 %v1284, %v1284
        %v1317 = vmul.f32 %v1285, %v1285
        %v1318 = vmul.f32 %v1286, %v1286
        %v1319 = vmul.f32 %v1287, %v1287
        %v1320 = vmul.f32 %v1288, %v1288
        %v1321 = vmul.f32 %v1289, %v1289
        %v1322 = vadd.f32 %v1290, %v1306
        %v1323 = vadd.f32 %v1291, %v1307
        %v1324 = vadd.f32 %v1292, %v1308
        %v1325 = vadd.f32 %v1293, %v1309
        %v1326 = vadd.f32 %v1294, %v1310
        %v1327 = vadd.f32 %v1295, %v1311
        %v1328 = vadd.f32 %v1296, %v1312
        %v1329 = vadd.f32 %v1297, %v1313
        %v1330 = vadd.f32 %v1298, %v1314
        %v1331 = vadd.f32 %v1299, %v1315
        %v1332 = vadd.f32 %v1300, %v1316
        %v1333 = vadd.f32 %v1301, %v1317
        %v1334 = vadd.f32 %v1302, %v1318
        %v1335 = vadd.f32 %v1303, %v1319
        %v1336 = vadd.f32 %v1304, %v1320
        %v1337 = vadd.f32 %v1305, %v1321
        %v1338 = vadd.f32 %v1322, 1e-08
        %v1339 = vadd.f32 %v1323, 1e-08
        %v1340 = vadd.f32 %v1324, 1e-08
        %v1341 = vadd.f32 %v1325, 1e-08
        %v1342 = vadd.f32 %v1326, 1e-08
        %v1343 = vadd.f32 %v1327, 1e-08
        %v1344 = vadd.f32 %v1328, 1e-08
        %v1345 = vadd.f32 %v1329, 1e-08
        %v1346 = vadd.f32 %v1330, 1e-08
        %v1347 = vadd.f32 %v1331, 1e-08
        %v1348 = vadd.f32 %v1332, 1e-08
        %v1349 = vadd.f32 %v1333, 1e-08
        %v1350 = vadd.f32 %v1334, 1e-08
        %v1351 = vadd.f32 %v1335, 1e-08
        %v1352 = vadd.f32 %v1336, 1e-08
        %v1353 = vadd.f32 %v1337, 1e-08
        %v1354 = vrsqrt.pop %v1338
        %v1355 = vmul.f32 %v1354, %v1338
        %v1356 = vmul.f32 %v1355, %v1354
        %v1357 = vmul.f32 0.5, %v1356
        %v1358 = vsub.f32 1.5, %v1357
        %v1359 = vmul.f32 %v1354, %v1358
        %v1360 = vmul.f32 %v1338, %v1359
        %vm1361 = vcmp.eq.f32.partialorder %v1338, inf
        %v1362 = vsel %vm1361, %v1338, %v1360
        %vm1363 = vcmp.eq.f32.partialorder %v1338, 0.0
        %v1364 = vand.u32 %v1338, 2147483648
        %v1365 = vsel %vm1363, %v1364, %v1362
        %v1366 = vrsqrt.pop %v1339
        %v1367 = vmul.f32 %v1366, %v1339
        %v1368 = vmul.f32 %v1367, %v1366
        %v1369 = vmul.f32 0.5, %v1368
        %v1370 = vsub.f32 1.5, %v1369
        %v1371 = vmul.f32 %v1366, %v1370
        %v1372 = vmul.f32 %v1339, %v1371
        %vm1373 = vcmp.eq.f32.partialorder %v1339, inf
        %v1374 = vsel %vm1373, %v1339, %v1372
        %vm1375 = vcmp.eq.f32.partialorder %v1339, 0.0
        %v1376 = vand.u32 %v1339, 2147483648
        %v1377 = vsel %vm1375, %v1376, %v1374
        %v1378 = vrsqrt.pop %v1340
        %v1379 = vmul.f32 %v1378, %v1340
        %v1380 = vmul.f32 %v1379, %v1378
        %v1381 = vmul.f32 0.5, %v1380
        %v1382 = vsub.f32 1.5, %v1381
        %v1383 = vmul.f32 %v1378, %v1382
        %v1384 = vmul.f32 %v1340, %v1383
        %vm1385 = vcmp.eq.f32.partialorder %v1340, inf
        %v1386 = vsel %vm1385, %v1340, %v1384
        %vm1387 = vcmp.eq.f32.partialorder %v1340, 0.0
        %v1388 = vand.u32 %v1340, 2147483648
        %v1389 = vsel %vm1387, %v1388, %v1386
        %v1390 = vrsqrt.pop %v1341
        %v1391 = vmul.f32 %v1390, %v1341
        %v1392 = vmul.f32 %v1391, %v1390
        %v1393 = vmul.f32 0.5, %v1392
        %v1394 = vsub.f32 1.5, %v1393
        %v1395 = vmul.f32 %v1390, %v1394
        %v1396 = vmul.f32 %v1341, %v1395
        %vm1397 = vcmp.eq.f32.partialorder %v1341, inf
        %v1398 = vsel %vm1397, %v1341, %v1396
        %vm1399 = vcmp.eq.f32.partialorder %v1341, 0.0
        %v1400 = vand.u32 %v1341, 2147483648
        %v1401 = vsel %vm1399, %v1400, %v1398
        %v1402 = vrsqrt.pop %v1342
        %v1403 = vmul.f32 %v1402, %v1342
        %v1404 = vmul.f32 %v1403, %v1402
        %v1405 = vmul.f32 0.5, %v1404
        %v1406 = vsub.f32 1.5, %v1405
        %v1407 = vmul.f32 %v1402, %v1406
        %v1408 = vmul.f32 %v1342, %v1407
        %vm1409 = vcmp.eq.f32.partialorder %v1342, inf
        %v1410 = vsel %vm1409, %v1342, %v1408
        %vm1411 = vcmp.eq.f32.partialorder %v1342, 0.0
        %v1412 = vand.u32 %v1342, 2147483648
        %v1413 = vsel %vm1411, %v1412, %v1410
        %v1414 = vrsqrt.pop %v1343
        %v1415 = vmul.f32 %v1414, %v1343
        %v1416 = vmul.f32 %v1415, %v1414
        %v1417 = vmul.f32 0.5, %v1416
        %v1418 = vsub.f32 1.5, %v1417
        %v1419 = vmul.f32 %v1414, %v1418
        %v1420 = vmul.f32 %v1343, %v1419
        %vm1421 = vcmp.eq.f32.partialorder %v1343, inf
        %v1422 = vsel %vm1421, %v1343, %v1420
        %vm1423 = vcmp.eq.f32.partialorder %v1343, 0.0
        %v1424 = vand.u32 %v1343, 2147483648
        %v1425 = vsel %vm1423, %v1424, %v1422
        %v1426 = vrsqrt.pop %v1344
        %v1427 = vmul.f32 %v1426, %v1344
        %v1428 = vmul.f32 %v1427, %v1426
        %v1429 = vmul.f32 0.5, %v1428
        %v1430 = vsub.f32 1.5, %v1429
        %v1431 = vmul.f32 %v1426, %v1430
        %v1432 = vmul.f32 %v1344, %v1431
        %vm1433 = vcmp.eq.f32.partialorder %v1344, inf
        %v1434 = vsel %vm1433, %v1344, %v1432
        %vm1435 = vcmp.eq.f32.partialorder %v1344, 0.0
        %v1436 = vand.u32 %v1344, 2147483648
        %v1437 = vsel %vm1435, %v1436, %v1434
        %v1438 = vrsqrt.pop %v1345
        %v1439 = vmul.f32 %v1438, %v1345
        %v1440 = vmul.f32 %v1439, %v1438
        %v1441 = vmul.f32 0.5, %v1440
        %v1442 = vsub.f32 1.5, %v1441
        %v1443 = vmul.f32 %v1438, %v1442
        %v1444 = vmul.f32 %v1345, %v1443
        %vm1445 = vcmp.eq.f32.partialorder %v1345, inf
        %v1446 = vsel %vm1445, %v1345, %v1444
        %vm1447 = vcmp.eq.f32.partialorder %v1345, 0.0
        %v1448 = vand.u32 %v1345, 2147483648
        %v1449 = vsel %vm1447, %v1448, %v1446
        %v1450 = vrsqrt.pop %v1346
        %v1451 = vmul.f32 %v1450, %v1346
        %v1452 = vmul.f32 %v1451, %v1450
        %v1453 = vmul.f32 0.5, %v1452
        %v1454 = vsub.f32 1.5, %v1453
        %v1455 = vmul.f32 %v1450, %v1454
        %v1456 = vmul.f32 %v1346, %v1455
        %vm1457 = vcmp.eq.f32.partialorder %v1346, inf
        %v1458 = vsel %vm1457, %v1346, %v1456
        %vm1459 = vcmp.eq.f32.partialorder %v1346, 0.0
        %v1460 = vand.u32 %v1346, 2147483648
        %v1461 = vsel %vm1459, %v1460, %v1458
        %v1462 = vrsqrt.pop %v1347
        %v1463 = vmul.f32 %v1462, %v1347
        %v1464 = vmul.f32 %v1463, %v1462
        %v1465 = vmul.f32 0.5, %v1464
        %v1466 = vsub.f32 1.5, %v1465
        %v1467 = vmul.f32 %v1462, %v1466
        %v1468 = vmul.f32 %v1347, %v1467
        %vm1469 = vcmp.eq.f32.partialorder %v1347, inf
        %v1470 = vsel %vm1469, %v1347, %v1468
        %vm1471 = vcmp.eq.f32.partialorder %v1347, 0.0
        %v1472 = vand.u32 %v1347, 2147483648
        %v1473 = vsel %vm1471, %v1472, %v1470
        %v1474 = vrsqrt.pop %v1348
        %v1475 = vmul.f32 %v1474, %v1348
        %v1476 = vmul.f32 %v1475, %v1474
        %v1477 = vmul.f32 0.5, %v1476
        %v1478 = vsub.f32 1.5, %v1477
        %v1479 = vmul.f32 %v1474, %v1478
        %v1480 = vmul.f32 %v1348, %v1479
        %vm1481 = vcmp.eq.f32.partialorder %v1348, inf
        %v1482 = vsel %vm1481, %v1348, %v1480
        %vm1483 = vcmp.eq.f32.partialorder %v1348, 0.0
        %v1484 = vand.u32 %v1348, 2147483648
        %v1485 = vsel %vm1483, %v1484, %v1482
        %v1486 = vrsqrt.pop %v1349
        %v1487 = vmul.f32 %v1486, %v1349
        %v1488 = vmul.f32 %v1487, %v1486
        %v1489 = vmul.f32 0.5, %v1488
        %v1490 = vsub.f32 1.5, %v1489
        %v1491 = vmul.f32 %v1486, %v1490
        %v1492 = vmul.f32 %v1349, %v1491
        %vm1493 = vcmp.eq.f32.partialorder %v1349, inf
        %v1494 = vsel %vm1493, %v1349, %v1492
        %vm1495 = vcmp.eq.f32.partialorder %v1349, 0.0
        %v1496 = vand.u32 %v1349, 2147483648
        %v1497 = vsel %vm1495, %v1496, %v1494
        %v1498 = vrsqrt.pop %v1350
        %v1499 = vmul.f32 %v1498, %v1350
        %v1500 = vmul.f32 %v1499, %v1498
        %v1501 = vmul.f32 0.5, %v1500
        %v1502 = vsub.f32 1.5, %v1501
        %v1503 = vmul.f32 %v1498, %v1502
        %v1504 = vmul.f32 %v1350, %v1503
        %vm1505 = vcmp.eq.f32.partialorder %v1350, inf
        %v1506 = vsel %vm1505, %v1350, %v1504
        %vm1507 = vcmp.eq.f32.partialorder %v1350, 0.0
        %v1508 = vand.u32 %v1350, 2147483648
        %v1509 = vsel %vm1507, %v1508, %v1506
        %v1510 = vrsqrt.pop %v1351
        %v1511 = vmul.f32 %v1510, %v1351
        %v1512 = vmul.f32 %v1511, %v1510
        %v1513 = vmul.f32 0.5, %v1512
        %v1514 = vsub.f32 1.5, %v1513
        %v1515 = vmul.f32 %v1510, %v1514
        %v1516 = vmul.f32 %v1351, %v1515
        %vm1517 = vcmp.eq.f32.partialorder %v1351, inf
        %v1518 = vsel %vm1517, %v1351, %v1516
        %vm1519 = vcmp.eq.f32.partialorder %v1351, 0.0
        %v1520 = vand.u32 %v1351, 2147483648
        %v1521 = vsel %vm1519, %v1520, %v1518
        %v1522 = vrsqrt.pop %v1352
        %v1523 = vmul.f32 %v1522, %v1352
        %v1524 = vmul.f32 %v1523, %v1522
        %v1525 = vmul.f32 0.5, %v1524
        %v1526 = vsub.f32 1.5, %v1525
        %v1527 = vmul.f32 %v1522, %v1526
        %v1528 = vmul.f32 %v1352, %v1527
        %vm1529 = vcmp.eq.f32.partialorder %v1352, inf
        %v1530 = vsel %vm1529, %v1352, %v1528
        %vm1531 = vcmp.eq.f32.partialorder %v1352, 0.0
        %v1532 = vand.u32 %v1352, 2147483648
        %v1533 = vsel %vm1531, %v1532, %v1530
        %v1534 = vrsqrt.pop %v1353
        %v1535 = vmul.f32 %v1534, %v1353
        %v1536 = vmul.f32 %v1535, %v1534
        %v1537 = vmul.f32 0.5, %v1536
        %v1538 = vsub.f32 1.5, %v1537
        %v1539 = vmul.f32 %v1534, %v1538
        %v1540 = vmul.f32 %v1353, %v1539
        %vm1541 = vcmp.eq.f32.partialorder %v1353, inf
        %v1542 = vsel %vm1541, %v1353, %v1540
        %vm1543 = vcmp.eq.f32.partialorder %v1353, 0.0
        %v1544 = vand.u32 %v1353, 2147483648
        %v1545 = vsel %vm1543, %v1544, %v1542
        %v1546 = vld [vmem:[#allocation8] sm:$0xff]
        %v1547 = vld [vmem:[#allocation8 + $0x8] sm:$0xff]
        %v1548 = vld [vmem:[#allocation8 + $0x10] sm:$0xff]
        %v1549 = vld [vmem:[#allocation8 + $0x18] sm:$0xff]
        %v1550 = vld [vmem:[#allocation8 + $0x20] sm:$0xff]
        %v1551 = vld [vmem:[#allocation8 + $0x28] sm:$0xff]
        %v1552 = vld [vmem:[#allocation8 + $0x30] sm:$0xff]
        %v1553 = vld [vmem:[#allocation8 + $0x38] sm:$0xff]
        %v1554 = vld [vmem:[#allocation8 + $0x40] sm:$0xff]
        %v1555 = vld [vmem:[#allocation8 + $0x48] sm:$0xff]
        %1556 = vmatpush.msra.mxu0 %v1545
        %1557 = vmatpush.msra.mxu0 %v1533
        %1558 = vmatpush.msra.mxu0 %v1521
        %1559 = vmatpush.msra.mxu0 %v1509
        %1560 = vmatpush.msra.mxu0 %v1497
        %1561 = vmatpush.msra.mxu0 %v1485
        %1562 = vmatpush.msra.mxu0 %v1473
        %1563 = vmatpush.msra.mxu0 %v1461
        %1564 = vmatpush.msra.mxu0 %v1449
        %1565 = vmatpush.msra.mxu0 %v1437
        %1566 = vmatpush.msra.mxu0 %v1425
        %1567 = vmatpush.msra.mxu0 %v1413
        %1568 = vmatpush.msra.mxu0 %v1401
        %1569 = vmatpush.msra.mxu0 %v1389
        %1570 = vmatpush.msra.mxu0 %v1377
        %1571 = vmatpush.msra.mxu0 %v1365
        %1572 = vmatmul.f32.gmra.mxu0 %v1546
        %v1573 = vpop.f32.mrf.mxu0
        %v1574 = vadd.f32 0.0, %v1573
        %1575 = vmatmul.f32.gmra.mxu0 %v1547
        %v1576 = vpop.f32.mrf.mxu0
        %v1577 = vadd.f32 0.0, %v1576
        %1578 = vmatmul.f32.gmra.mxu0 %v1548
        %v1579 = vpop.f32.mrf.mxu0
        %v1580 = vadd.f32 0.0, %v1579
        %1581 = vmatmul.f32.gmra.mxu0 %v1549
        %v1582 = vpop.f32.mrf.mxu0
        %v1583 = vadd.f32 0.0, %v1582
        %1584 = vmatmul.f32.gmra.mxu0 %v1550
        %v1585 = vpop.f32.mrf.mxu0
        %v1586 = vadd.f32 0.0, %v1585
        %1587 = vmatmul.f32.gmra.mxu0 %v1551
        %v1588 = vpop.f32.mrf.mxu0
        %v1589 = vadd.f32 0.0, %v1588
        %1590 = vmatmul.f32.gmra.mxu0 %v1552
        %v1591 = vpop.f32.mrf.mxu0
        %v1592 = vadd.f32 0.0, %v1591
        %1593 = vmatmul.f32.gmra.mxu0 %v1553
        %v1594 = vpop.f32.mrf.mxu0
        %v1595 = vadd.f32 0.0, %v1594
        %1596 = vmatmul.f32.gmra.mxu0 %v1554
        %v1597 = vpop.f32.mrf.mxu0
        %v1598 = vadd.f32 0.0, %v1597
        %1599 = vmatmul.f32.gmra.mxu0 %v1555
        %v1600 = vpop.f32.mrf.mxu0
        %v1601 = vadd.f32 0.0, %v1600
        %1602 = vdwg.mxu0
        %v1603 = vmax.f32 %v1574, 1e-05
        %v1604 = vmax.f32 %v1577, 1e-05
        %v1605 = vmax.f32 %v1580, 1e-05
        %v1606 = vmax.f32 %v1583, 1e-05
        %v1607 = vmax.f32 %v1586, 1e-05
        %v1608 = vmax.f32 %v1589, 1e-05
        %v1609 = vmax.f32 %v1592, 1e-05
        %v1610 = vmax.f32 %v1595, 1e-05
        %v1611 = vmax.f32 %v1598, 1e-05
        %v1612 = vmax.f32 %v1601, 1e-05
        %v1613 = vlog2.pop %v1603
        %v1614 = vmul.f32 %v1613, 0.6931472
        %v1615 = vlog2.pop %v1604
        %v1616 = vmul.f32 %v1615, 0.6931472
        %v1617 = vlog2.pop %v1605
        %v1618 = vmul.f32 %v1617, 0.6931472
        %v1619 = vlog2.pop %v1606
        %v1620 = vmul.f32 %v1619, 0.6931472
        %v1621 = vlog2.pop %v1607
        %v1622 = vmul.f32 %v1621, 0.6931472
        %v1623 = vlog2.pop %v1608
        %v1624 = vmul.f32 %v1623, 0.6931472
        %v1625 = vlog2.pop %v1609
        %v1626 = vmul.f32 %v1625, 0.6931472
        %v1627 = vlog2.pop %v1610
        %v1628 = vmul.f32 %v1627, 0.6931472
        %v1629 = vlog2.pop %v1611
        %v1630 = vmul.f32 %v1629, 0.6931472
        %v1631 = vlog2.pop %v1612
        %v1632 = vmul.f32 %v1631, 0.6931472
        %v1633 = vmul.f32 %v1614, 0.4342945
        %v1634 = vmul.f32 %v1616, 0.4342945
        %v1635 = vmul.f32 %v1618, 0.4342945
        %v1636 = vmul.f32 %v1620, 0.4342945
        %v1637 = vmul.f32 %v1622, 0.4342945
        %v1638 = vmul.f32 %v1624, 0.4342945
        %v1639 = vmul.f32 %v1626, 0.4342945
        %v1640 = vmul.f32 %v1628, 0.4342945
        %v1641 = vmul.f32 %v1630, 0.4342945
        %v1642 = vmul.f32 %v1632, 0.4342945
        %1643 = vst [vmem:[%s315] sm:$0xff] %v1633
        %1644 = vst [vmem:[%s315 + $0x8] sm:$0xff] %v1634
        %1645 = vst [vmem:[%s315 + $0x10] sm:$0xff] %v1635
        %1646 = vst [vmem:[%s315 + $0x18] sm:$0xff] %v1636
        %1647 = vst [vmem:[%s315 + $0x20] sm:$0xff] %v1637
        %1648 = vst [vmem:[%s315 + $0x28] sm:$0xff] %v1638
        %1649 = vst [vmem:[%s315 + $0x30] sm:$0xff] %v1639
        %1650 = vst [vmem:[%s315 + $0x38] sm:$0xff] %v1640
        %1651 = vst [vmem:[%s315 + $0x40] sm:$0xff] %v1641
        %1652 = vst [vmem:[%s315 + $0x48] sm:$0xff] %v1642
        %s1653 = sand.u32 %s147, 1
        %s1654 = scalar_lea.sflag [#allocation4], %s1653
        %s1655 = sand.u32 %s147, 1
        %s1656 = smul.addr %s1655, 80
        %s1657 = scalar_lea.vmem [#allocation10], %s1656
        // Predicated region
        $region53: #{tpu_custom_call.1} parent=35 // pred_check
          %p1658 = pneg %p157
        $region54: #{tpu_custom_call.1} parent=35 // pred_check_branch
          %1660 = sbr.rel (%p1658) target = $region56
        $region55: #{tpu_custom_call.1} parent=35 // pred_region
          %1662 = vsyncadd %s1654, 0
          %s1663 = smul.addr %s29, 10
          %s1664 = sadd.s32 %s30, %s1663
          %s1665 = smul.addr %s1664, 8
          %s1666 = scalar_lea.hbm %s4, %s1665
          %s1667 = sshll.u32 %s1657, 4
          %s1668 = int_to_ptr.vmem [resolvable:$true] %s1667
          %s1669 = sshll.u32 %s1666, 4
          %s1670 = int_to_ptr.hbm [resolvable:$true] %s1669
          %1675 = dma.vmem_to_hbm [thread:$0]  %s1668, 1280, %s1670, %s1654, 128, 128, 8
        $region56: #{tpu_custom_call.1} parent=35 // pred_fallthru
          _
      $region36: #{tpu_custom_call.1} parent=5 // pred_fallthru
        _
      %p1676 = scmp.le.s32.totalorder 2, %s20
      // Predicated region
      $region57: #{tpu_custom_call.1} parent=5 // pred_check
        %p1677 = pneg %p1676
      $region58: #{tpu_custom_call.1} parent=5 // pred_check_branch
        %1679 = sbr.rel (%p1677) target = $region60
      $region59: #{tpu_custom_call.1} parent=5 // pred_region
        %s1680 = ssub.s32 %s20, 2
        // Predicated region
        $region61: #{tpu_custom_call.1} parent=59 // pred_check
          %p1681 = pneg %p163
        $region62: #{tpu_custom_call.1} parent=59 // pred_check_branch
          %1683 = sbr.rel (%p1681) target = $region64
        $region63: #{tpu_custom_call.1} parent=59 // pred_region
          %s1684 = sand.u32 %s148, 1
          %s1685 = scalar_lea.sflag [#allocation4], %s1684
          %s1686 = sand.u32 %s148, 1
          %s1687 = smul.addr %s1686, 80
          %s1688 = scalar_lea.vmem [#allocation10], %s1687
          %1690 = dma.done %s1685, 1280
        $region64: #{tpu_custom_call.1} parent=59 // pred_fallthru
          _
      $region60: #{tpu_custom_call.1} parent=5 // pred_fallthru
        _
    $region6: #{tpu_custom_call.1} parent=1 // loop_footer
      %s24 = sadd.s32 1, %s20
    $region7: #{tpu_custom_call.1} parent=1 // loop_footer_branch
      %19 = sbr.rel target = $region3
    $region8: #{tpu_custom_call.1} parent=1 // loop_exit
      _
    %1691 = vsyncpa [#allocation3], 1
    %s1692 = scalar_lea.sflag [#allocation3], 1
    %1693 = vsyncpa %s1692, 1
    %1694 = vsyncpa [#allocation6], 1
    %s1695 = scalar_lea.sflag [#allocation6], 1
    %1696 = vsyncpa %s1695, 1
    %1697 = vsyncpa [#allocation9], 1
    %1698 = vsyncpa [#allocation4], 1
    %s1699 = scalar_lea.sflag [#allocation4], 1
    %1700 = vsyncpa %s1699, 1

</llo_original>
